<compile_context>
chip_gen: v6e
topology: v6e:2x2x1
jax: 0.10.0
libtpu: 0.0.40
codegen_flags: <defaults>
</compile_context>

<pallas_src>
import functools

import jax
import jax.numpy as jnp
from jax import lax
from jax.experimental import pallas as pl
from jax.experimental.pallas import tpu as pltpu


def _round_up(x, m):
    return (x + m - 1) // m * m


def _aspp_kernel(xs_ref, wc_ref, bc_ref, w0_ref, b0_ref, w1_ref, b1_ref, o_ref,
                 *, NB, H, W, dil, Cin, NC):
    """Processes NB batch elements per grid step.

    xs_ref : (NB, H + 2*dil, W, 3*Cin)  bf16  W-pre-shifted taps, channel-packed
    wc_ref : (3, 3*Cin, CP)             bf16  3x3 conv weights, one row per ky
    bc_ref : (1, CP)                    f32
    w0_ref : (CP, CP)                   bf16  fconv0 (1x1)
    b0_ref : (1, CP)                    f32
    w1_ref : (CP, NCP)                  bf16  fconv1 (1x1)
    b1_ref : (1, NCP)                   f32
    o_ref  : (NB, NC, H*W)              f32   flat-NCHW output block
    (CP / NCP are Cout / num_classes zero-padded up to a multiple of 128.)
    """
    M = NB * H * W
    K = 3 * Cin
    CP = w0_ref.shape[0]

    # --- dilated 3x3 conv: 3 matmuls (one per kernel row), K = 3*Cin --------
    # Bias doubles as accumulator init (saves one M x CP VPU add).
    acc = jnp.broadcast_to(bc_ref[...], (M, CP)).astype(jnp.float32)
    for ky in range(3):
        tap = xs_ref[:, ky * dil:ky * dil + H, :, :]      # (NB, H, W, 3*Cin)
        tap = tap.reshape(M, K)                            # aligned merge only
        acc = acc + jnp.dot(tap, wc_ref[ky],
                            preferred_element_type=jnp.float32)
    h = jnp.maximum(acc, 0.0)                              # relu(conv), f32

    # --- fconv0 (1x1) + relu -------------------------------------------------
    h = jnp.dot(h.astype(jnp.bfloat16), w0_ref[...],
                preferred_element_type=jnp.float32) + b0_ref[...]
    h = jnp.maximum(h, 0.0)

    # --- fconv1 (1x1), no activation ----------------------------------------
    out = jnp.dot(h.astype(jnp.bfloat16), w1_ref[...],
                  preferred_element_type=jnp.float32) + b1_ref[...]  # (M, NCP)

    # --- lane-dense store: (NC, H*W) per batch element (flat NCHW) ----------
    out = out.reshape(NB, H * W, out.shape[-1])            # split leading dim
    for b in range(NB):
        # (H*W, 128) -> (128, H*W) native-shape transpose, keep first NC rows.
        o_ref[b, :, :] = out[b].T[:NC, :].astype(o_ref.dtype)


def _pick_batch_block(N, per_elem_bytes, budget_bytes=6 * 1024 * 1024,
                      min_grid=2):
    """Largest divisor-of-N batch block that fits the VMEM budget, while
    preferring >= min_grid grid steps (so `parallel` can shard across the two
    TensorCores of a v7x chip)."""
    nb = int(max(1, min(N, budget_bytes // max(per_elem_bytes, 1))))
    if N >= min_grid:
        nb = min(nb, max(1, N // min_grid))
    while N % nb:
        nb -= 1
    return nb


def aspp_forward(x_nchw, params, *, dilation):
    """Runs the _ASPP forward pass. x_nchw: (N, Cin, H, W) f32 -> (N, NC, H, W)."""
    w_conv, b_conv, w_f0, b_f0, w_f1, b_f1 = params
    N, Cin, H, W = x_nchw.shape
    Cout = w_conv.shape[-1]
    NC = w_f1.shape[-1]
    d = dilation
    Hp = H + 2 * d

    # The in-kernel (NB, H, W, 3*Cin) -> (NB*H*W, 3*Cin) merge needs W to be
    # sublane-aligned.
    assert W % 8 == 0, "this kernel expects W to be a multiple of 8"

    # Channel widths padded to full 128-lane width (free on MXU/VPU).
    CP = _round_up(Cout, 128)
    NCP = _round_up(NC, 128)

    # --- layout plumbing (wrapper side, XLA) ---------------------------------
    x_nhwc = jnp.transpose(x_nchw, (0, 2, 3, 1)).astype(jnp.bfloat16)
    x_pad = jnp.pad(x_nhwc, ((0, 0), (d, d), (d, d), (0, 0)))
    # Pre-shift along W for the 3 kernel columns and pack them on channels.
    xs = jnp.concatenate(
        [x_pad[:, :, kx * d:kx * d + W, :] for kx in range(3)], axis=-1
    )                                                      # (N, Hp, W, 3*Cin)

    # Weights: bf16, kernel-row-major, zero-padded to lane-dense widths.
    wc = jnp.zeros((3, 3 * Cin, CP), jnp.bfloat16)
    wc = wc.at[:, :, :Cout].set(w_conv.reshape(3, 3 * Cin, Cout).astype(jnp.bfloat16))
    bc = jnp.zeros((1, CP), jnp.float32).at[0, :Cout].set(b_conv)
    w0 = jnp.zeros((CP, CP), jnp.bfloat16).at[:Cout, :Cout].set(w_f0.astype(jnp.bfloat16))
    b0 = jnp.zeros((1, CP), jnp.float32).at[0, :Cout].set(b_f0)
    w1 = jnp.zeros((CP, NCP), jnp.bfloat16).at[:Cout, :NC].set(w_f1.astype(jnp.bfloat16))
    b1 = jnp.zeros((1, NCP), jnp.float32).at[0, :NC].set(b_f1)

    # Per-batch-element VMEM cost of one grid step (input block + f32
    # intermediates + output block); weight buffers are shared/constant.
    per_elem = (Hp * W * 3 * Cin * 2        # xs block (bf16)
                + 4 * H * W * CP * 4        # f32 intermediates
                + H * W * NC * 4)           # output block
    NB = _pick_batch_block(N, per_elem)

    kernel = functools.partial(_aspp_kernel, NB=NB, H=H, W=W, dil=d,
                               Cin=Cin, NC=NC)

    # TODO(synk): for production ASPP shapes (Cin 512-2048, large H, dilation
    # up to 24) the padded block will not fit VMEM (v7x: 64 MiB); add a grid
    # axis over H row-tiles with a 2*dil-row halo plus Cout column blocks, and
    # single-buffer the constant weight operands.
    out_flat = pl.pallas_call(
        kernel,
        out_shape=jax.ShapeDtypeStruct((N, NC, H * W), jnp.float32),
        grid_spec=pltpu.PrefetchScalarGridSpec(
            num_scalar_prefetch=0,
            grid=(N // NB,),
            in_specs=[
                pl.BlockSpec((NB, Hp, W, 3 * Cin), lambda i: (i, 0, 0, 0)),
                pl.BlockSpec((3, 3 * Cin, CP), lambda i: (0, 0, 0)),
                pl.BlockSpec((1, CP), lambda i: (0, 0)),
                pl.BlockSpec((CP, CP), lambda i: (0, 0)),
                pl.BlockSpec((1, CP), lambda i: (0, 0)),
                pl.BlockSpec((CP, NCP), lambda i: (0, 0)),
                pl.BlockSpec((1, NCP), lambda i: (0, 0)),
            ],
            out_specs=pl.BlockSpec((NB, NC, H * W), lambda i: (i, 0, 0)),
        ),
        compiler_params=pltpu.CompilerParams(
            dimension_semantics=("parallel",),
            vmem_limit_bytes=32 * 1024 * 1024),
    )(xs, wc, bc, w0, b0, w1, b1)

    # Flat NCHW -> NCHW (pure reshape, no transpose needed).
    return out_flat.reshape(N, NC, H, W)


def aspp_reference(x_nchw, params, *, dilation):
    """Pure-JAX f32 reference using lax.conv_general_dilated (NHWC/HWIO)."""
    w_conv, b_conv, w_f0, b_f0, w_f1, b_f1 = params
    d = dilation
    x = jnp.transpose(x_nchw, (0, 2, 3, 1))
    dn = ("NHWC", "HWIO", "NHWC")

    x = lax.conv_general_dilated(x, w_conv, window_strides=(1, 1),
                                 padding=[(d, d), (d, d)],
                                 rhs_dilation=(d, d),
                                 dimension_numbers=dn) + b_conv
    x = jnp.maximum(x, 0.0)
    x = lax.conv_general_dilated(x, w_f0[None, None], (1, 1), "VALID",
                                 dimension_numbers=dn) + b_f0
    x = jnp.maximum(x, 0.0)
    x = lax.conv_general_dilated(x, w_f1[None, None], (1, 1), "VALID",
                                 dimension_numbers=dn) + b_f1
    return jnp.transpose(x, (0, 3, 1, 2))


def init_params(key, in_channel, out_channel, num_classes):
    """Deterministic synthetic parameters (shapes match the torch module)."""
    ks = jax.random.split(key, 6)
    # conv: (3, 3, Cin, Cout) in HWIO
    w_conv = jax.random.normal(ks[0], (3, 3, in_channel, out_channel),
                               jnp.float32) * (1.0 / (3 * 3 * in_channel) ** 0.5)
    b_conv = jax.random.normal(ks[1], (out_channel,), jnp.float32) * 0.01
    # fconv0: 1x1 -> (Cout, Cout)
    w_f0 = jax.random.normal(ks[2], (out_channel, out_channel),
                             jnp.float32) * (1.0 / out_channel ** 0.5)
    b_f0 = jax.random.normal(ks[3], (out_channel,), jnp.float32) * 0.01
    # fconv1: 1x1 -> (Cout, num_classes)
    w_f1 = jax.random.normal(ks[4], (out_channel, num_classes),
                             jnp.float32) * (1.0 / out_channel ** 0.5)
    b_f1 = jax.random.normal(ks[5], (num_classes,), jnp.float32) * 0.01
    return (w_conv, b_conv, w_f0, b_f0, w_f1, b_f1)


if __name__ == "__main__":
    # small shapes consistent with the module
    N, Cin, H, W = 2, 8, 16, 16
    Cout, num_classes, dilation = 16, 8, 2

    key = jax.random.PRNGKey(0)
    kx, kp = jax.random.split(key)
    x = jax.random.normal(kx, (N, Cin, H, W), jnp.float32)  # NCHW like torch
    params = init_params(kp, Cin, Cout, num_classes)

    out = aspp_forward(x, params, dilation=dilation)
    out = jax.block_until_ready(out)

    ref = jax.block_until_ready(aspp_reference(x, params, dilation=dilation))
    assert out.shape == (N, num_classes, H, W), out.shape
    # bf16 matmul inputs (f32 accumulation) vs. an all-f32 reference -> loose
    # tolerance; values are O(1).
    assert jnp.allclose(out, ref, rtol=5e-2, atol=5e-2), \
        float(jnp.max(jnp.abs(out - ref)))

    print("KERNEL_OK")
</pallas_src>

<mosaic_0001>
module attributes {stable_mosaic.version = 11 : i64} {
  func.func @_aspp_kernel(%arg0: i32, %arg1: memref<1x20x16x24xbf16, #tpu.memory_space<vmem>>, %arg2: memref<3x24x128xbf16, #tpu.memory_space<vmem>>, %arg3: memref<1x128xf32, #tpu.memory_space<vmem>>, %arg4: memref<128x128xbf16, #tpu.memory_space<vmem>>, %arg5: memref<1x128xf32, #tpu.memory_space<vmem>>, %arg6: memref<128x128xbf16, #tpu.memory_space<vmem>>, %arg7: memref<1x128xf32, #tpu.memory_space<vmem>>, %arg8: memref<1x8x256xf32, #tpu.memory_space<vmem>>) attributes {dimension_semantics = [#tpu.dimension_semantics<parallel>], iteration_bounds = array<i64: 2>, scalar_prefetch = 0 : i64, scratch_operands = 0 : i64, tpu.core_type = #tpu.core_type<tc>, window_params = [{transform_indices = @transform_0, window_bounds = array<i64: 1, 20, 16, 24>}, {pipeline_mode = #tpu.pipeline_mode<synchronous>, transform_indices = @transform_1, window_bounds = array<i64: 3, 24, 128>}, {pipeline_mode = #tpu.pipeline_mode<synchronous>, transform_indices = @transform_2, window_bounds = array<i64: 1, 128>}, {pipeline_mode = #tpu.pipeline_mode<synchronous>, transform_indices = @transform_3, window_bounds = array<i64: 128, 128>}, {pipeline_mode = #tpu.pipeline_mode<synchronous>, transform_indices = @transform_4, window_bounds = array<i64: 1, 128>}, {pipeline_mode = #tpu.pipeline_mode<synchronous>, transform_indices = @transform_5, window_bounds = array<i64: 128, 128>}, {pipeline_mode = #tpu.pipeline_mode<synchronous>, transform_indices = @transform_6, window_bounds = array<i64: 1, 128>}, {transform_indices = @transform_7, window_bounds = array<i64: 1, 8, 256>}]} {
    %c0 = arith.constant 0 : index
    %c0_0 = arith.constant 0 : index
    %0 = vector.load %arg3[%c0, %c0_0] : memref<1x128xf32, #tpu.memory_space<vmem>>, vector<1x128xf32>
    %1 = vector.shape_cast %0 : vector<1x128xf32> to vector<1x128xf32>
    %2 = vector.broadcast %1 : vector<1x128xf32> to vector<256x128xf32>
    %c0_1 = arith.constant 0 : index
    %c0_2 = arith.constant 0 : index
    %c0_3 = arith.constant 0 : index
    %c0_4 = arith.constant 0 : index
    %3 = vector.load %arg1[%c0_1, %c0_2, %c0_3, %c0_4] : memref<1x20x16x24xbf16, #tpu.memory_space<vmem>>, vector<1x16x16x24xbf16>
    %4 = vector.shape_cast %3 : vector<1x16x16x24xbf16> to vector<256x24xbf16>
    %c0_5 = arith.constant 0 : index
    %c0_6 = arith.constant 0 : index
    %c0_7 = arith.constant 0 : index
    %5 = vector.load %arg2[%c0_5, %c0_6, %c0_7] : memref<3x24x128xbf16, #tpu.memory_space<vmem>>, vector<1x24x128xbf16>
    %6 = vector.shape_cast %5 : vector<1x24x128xbf16> to vector<24x128xbf16>
    %cst = arith.constant dense<0.000000e+00> : vector<256x128xf32>
    %7 = tpu.matmul %4, %6, %cst {dimension_numbers = #tpu.dot_dimension_numbers<[1], [0], [0], [1], [0, 0, 1, 1], [], []>} : vector<256x24xbf16>, vector<24x128xbf16>, vector<256x128xf32> -> vector<256x128xf32>
    %8 = arith.addf %2, %7 : vector<256x128xf32>
    %c0_8 = arith.constant 0 : index
    %c2 = arith.constant 2 : index
    %c0_9 = arith.constant 0 : index
    %c0_10 = arith.constant 0 : index
    %9 = vector.load %arg1[%c0_8, %c2, %c0_9, %c0_10] : memref<1x20x16x24xbf16, #tpu.memory_space<vmem>>, vector<1x16x16x24xbf16>
    %10 = vector.shape_cast %9 : vector<1x16x16x24xbf16> to vector<256x24xbf16>
    %c1 = arith.constant 1 : index
    %c0_11 = arith.constant 0 : index
    %c0_12 = arith.constant 0 : index
    %11 = vector.load %arg2[%c1, %c0_11, %c0_12] : memref<3x24x128xbf16, #tpu.memory_space<vmem>>, vector<1x24x128xbf16>
    %12 = vector.shape_cast %11 : vector<1x24x128xbf16> to vector<24x128xbf16>
    %cst_13 = arith.constant dense<0.000000e+00> : vector<256x128xf32>
    %13 = tpu.matmul %10, %12, %cst_13 {dimension_numbers = #tpu.dot_dimension_numbers<[1], [0], [0], [1], [0, 0, 1, 1], [], []>} : vector<256x24xbf16>, vector<24x128xbf16>, vector<256x128xf32> -> vector<256x128xf32>
    %14 = arith.addf %8, %13 : vector<256x128xf32>
    %c0_14 = arith.constant 0 : index
    %c4 = arith.constant 4 : index
    %c0_15 = arith.constant 0 : index
    %c0_16 = arith.constant 0 : index
    %15 = vector.load %arg1[%c0_14, %c4, %c0_15, %c0_16] : memref<1x20x16x24xbf16, #tpu.memory_space<vmem>>, vector<1x16x16x24xbf16>
    %16 = vector.shape_cast %15 : vector<1x16x16x24xbf16> to vector<256x24xbf16>
    %c2_17 = arith.constant 2 : index
    %c0_18 = arith.constant 0 : index
    %c0_19 = arith.constant 0 : index
    %17 = vector.load %arg2[%c2_17, %c0_18, %c0_19] : memref<3x24x128xbf16, #tpu.memory_space<vmem>>, vector<1x24x128xbf16>
    %18 = vector.shape_cast %17 : vector<1x24x128xbf16> to vector<24x128xbf16>
    %cst_20 = arith.constant dense<0.000000e+00> : vector<256x128xf32>
    %19 = tpu.matmul %16, %18, %cst_20 {dimension_numbers = #tpu.dot_dimension_numbers<[1], [0], [0], [1], [0, 0, 1, 1], [], []>} : vector<256x24xbf16>, vector<24x128xbf16>, vector<256x128xf32> -> vector<256x128xf32>
    %20 = arith.addf %14, %19 : vector<256x128xf32>
    %cst_21 = arith.constant 0.000000e+00 : f32
    %21 = vector.broadcast %cst_21 : f32 to vector<256x128xf32>
    %22 = arith.maximumf %20, %21 : vector<256x128xf32>
    %23 = arith.truncf %22 : vector<256x128xf32> to vector<256x128xbf16>
    %c0_22 = arith.constant 0 : index
    %c0_23 = arith.constant 0 : index
    %24 = vector.load %arg4[%c0_22, %c0_23] : memref<128x128xbf16, #tpu.memory_space<vmem>>, vector<128x128xbf16>
    %cst_24 = arith.constant dense<0.000000e+00> : vector<256x128xf32>
    %25 = tpu.matmul %23, %24, %cst_24 {dimension_numbers = #tpu.dot_dimension_numbers<[1], [0], [0], [1], [0, 0, 1, 1], [], []>} : vector<256x128xbf16>, vector<128x128xbf16>, vector<256x128xf32> -> vector<256x128xf32>
    %c0_25 = arith.constant 0 : index
    %c0_26 = arith.constant 0 : index
    %26 = vector.load %arg5[%c0_25, %c0_26] : memref<1x128xf32, #tpu.memory_space<vmem>>, vector<1x128xf32>
    %27 = vector.broadcast %26 : vector<1x128xf32> to vector<256x128xf32>
    %28 = arith.addf %25, %27 : vector<256x128xf32>
    %cst_27 = arith.constant 0.000000e+00 : f32
    %29 = vector.broadcast %cst_27 : f32 to vector<256x128xf32>
    %30 = arith.maximumf %28, %29 : vector<256x128xf32>
    %31 = arith.truncf %30 : vector<256x128xf32> to vector<256x128xbf16>
    %c0_28 = arith.constant 0 : index
    %c0_29 = arith.constant 0 : index
    %32 = vector.load %arg6[%c0_28, %c0_29] : memref<128x128xbf16, #tpu.memory_space<vmem>>, vector<128x128xbf16>
    %cst_30 = arith.constant dense<0.000000e+00> : vector<256x128xf32>
    %33 = tpu.matmul %31, %32, %cst_30 {dimension_numbers = #tpu.dot_dimension_numbers<[1], [0], [0], [1], [0, 0, 1, 1], [], []>} : vector<256x128xbf16>, vector<128x128xbf16>, vector<256x128xf32> -> vector<256x128xf32>
    %c0_31 = arith.constant 0 : index
    %c0_32 = arith.constant 0 : index
    %34 = vector.load %arg7[%c0_31, %c0_32] : memref<1x128xf32, #tpu.memory_space<vmem>>, vector<1x128xf32>
    %35 = vector.broadcast %34 : vector<1x128xf32> to vector<256x128xf32>
    %36 = arith.addf %33, %35 : vector<256x128xf32>
    %37 = vector.shape_cast %36 : vector<256x128xf32> to vector<1x256x128xf32>
    %38 = vector.shape_cast %37 : vector<1x256x128xf32> to vector<256x128xf32>
    %39 = tpu.transpose %38, [1, 0] : vector<256x128xf32> -> vector<128x256xf32>
    %40 = vector.extract_strided_slice %39 {offsets = [0, 0], sizes = [8, 256], strides = [1, 1]} : vector<128x256xf32> to vector<8x256xf32>
    %c0_33 = arith.constant 0 : index
    %c0_34 = arith.constant 0 : index
    %c0_35 = arith.constant 0 : index
    %41 = vector.load %arg8[%c0_33, %c0_34, %c0_35] : memref<1x8x256xf32, #tpu.memory_space<vmem>>, vector<1x8x256xf32>
    %42 = vector.shape_cast %41 : vector<1x8x256xf32> to vector<8x256xf32>
    %43 = vector.shape_cast %40 : vector<8x256xf32> to vector<1x8x256xf32>
    tpu.vector_store %arg8[%c0_33, %c0_34, %c0_35], %43 {strides = array<i32>} : memref<1x8x256xf32, #tpu.memory_space<vmem>>, vector<1x8x256xf32>,
    return
  }
  func.func @transform_0(%arg0: i32) -> (i32, i32, i32, i32) {
    %c0_i32 = arith.constant 0 : i32
    %c0_i32_0 = arith.constant 0 : i32
    %c0_i32_1 = arith.constant 0 : i32
    %c0_i32_2 = arith.constant 0 : i32
    return %arg0, %c0_i32, %c0_i32_0, %c0_i32_1 : i32, i32, i32, i32
  }
  func.func @transform_1(%arg0: i32) -> (i32, i32, i32) {
    %c0_i32 = arith.constant 0 : i32
    %c0_i32_0 = arith.constant 0 : i32
    %c0_i32_1 = arith.constant 0 : i32
    %c0_i32_2 = arith.constant 0 : i32
    return %c0_i32, %c0_i32_0, %c0_i32_1 : i32, i32, i32
  }
  func.func @transform_2(%arg0: i32) -> (i32, i32) {
    %c0_i32 = arith.constant 0 : i32
    %c0_i32_0 = arith.constant 0 : i32
    %c0_i32_1 = arith.constant 0 : i32
    return %c0_i32, %c0_i32_0 : i32, i32
  }
  func.func @transform_3(%arg0: i32) -> (i32, i32) {
    %c0_i32 = arith.constant 0 : i32
    %c0_i32_0 = arith.constant 0 : i32
    %c0_i32_1 = arith.constant 0 : i32
    return %c0_i32, %c0_i32_0 : i32, i32
  }
  func.func @transform_4(%arg0: i32) -> (i32, i32) {
    %c0_i32 = arith.constant 0 : i32
    %c0_i32_0 = arith.constant 0 : i32
    %c0_i32_1 = arith.constant 0 : i32
    return %c0_i32, %c0_i32_0 : i32, i32
  }
  func.func @transform_5(%arg0: i32) -> (i32, i32) {
    %c0_i32 = arith.constant 0 : i32
    %c0_i32_0 = arith.constant 0 : i32
    %c0_i32_1 = arith.constant 0 : i32
    return %c0_i32, %c0_i32_0 : i32, i32
  }
  func.func @transform_6(%arg0: i32) -> (i32, i32) {
    %c0_i32 = arith.constant 0 : i32
    %c0_i32_0 = arith.constant 0 : i32
    %c0_i32_1 = arith.constant 0 : i32
    return %c0_i32, %c0_i32_0 : i32, i32
  }
  func.func @transform_7(%arg0: i32) -> (i32, i32, i32) {
    %c0_i32 = arith.constant 0 : i32
    %c0_i32_0 = arith.constant 0 : i32
    %c0_i32_1 = arith.constant 0 : i32
    return %arg0, %c0_i32, %c0_i32_0 : i32, i32, i32
  }
}

</mosaic_0001>

<llo_original>
// kernel: tpu_custom_call.1
$region0: #{tpu_custom_call.1}
  #allocation0 [shape = 'u32[]', space=smem, size = 0x4, offset = 0x4, fixed_abs, tag = 'smem constant byte address 0x4 - core index']
  #allocation1 [shape = 'u32[144,128]{1,0:T(1,128)}', space=vmem, size = 0x12000, scoped, tag = 'internal scratch']
  %s0 = inlined_call_operand.hbm [shape: bf16[2,20,16,24], index: 0, kind: input, shape index: {}]
  %s1 = inlined_call_operand.hbm [shape: bf16[3,24,128], index: 1, kind: input, shape index: {}]
  %s2 = inlined_call_operand.vmem [shape: f32[1,128], index: 2, kind: input, shape index: {}]
  %s3 = inlined_call_operand.hbm [shape: bf16[128,128], index: 3, kind: input, shape index: {}]
  %s4 = inlined_call_operand.vmem [shape: f32[1,128], index: 4, kind: input, shape index: {}]
  %s5 = inlined_call_operand.hbm [shape: bf16[128,128], index: 5, kind: input, shape index: {}]
  %s6 = inlined_call_operand.vmem [shape: f32[1,128], index: 6, kind: input, shape index: {}]
  %s7 = inlined_call_operand.hbm [shape: f32[2,8,256], index: 7, kind: output, shape index: {}]
  %s8 = sld [smem:[#allocation0]]
  $region77: #{tpu_custom_call.1} parent=0
    _
  %s10 = ssub.s32 1, %s8
  %s11 = scalar_select 0, %s10, %s8
  $region1: #{tpu_custom_call.1} parent=0
    #allocation2 [shape = 'u8[163840]{0}', space=vmem, size = 0x28000, scoped, tag = 'input window, operand 0']
    #allocation3 [shape = 's32[2]{0}', space=sflag, size = 0x8, scoped, tag = 'scoped memory for tpu_custom_call.1']
    #allocation4 [shape = 's32[2]{0}', space=sflag, size = 0x8, scoped, tag = 'scoped memory for tpu_custom_call.1']
    #allocation5 [shape = 'u8[18432]{0}', space=vmem, size = 0x4800, scoped, tag = 'input window, operand 1, single buffered']
    #allocation6 [shape = 's32[1]{0}', space=sflag, size = 0x4, scoped, tag = 'scoped memory for tpu_custom_call.1']
    #allocation7 [shape = 'u8[32768]{0}', space=vmem, size = 0x8000, scoped, tag = 'input window, operand 3, single buffered']
    #allocation8 [shape = 'u8[32768]{0}', space=vmem, size = 0x8000, scoped, tag = 'input window, operand 5, single buffered']
    #allocation9 [shape = 's32[1]{0}', space=sflag, size = 0x4, scoped, tag = 'scoped memory for tpu_custom_call.1']
    #allocation10 [shape = 'u8[16384]{0}', space=vmem, size = 0x4000, scoped, tag = 'output window, operand 0']
    %12 = vsyncpa [#allocation3], 0
    %s13 = scalar_lea.sflag [#allocation3], 1
    %14 = vsyncpa %s13, 0
    %15 = vsyncpa [#allocation6], 0
    %16 = vsyncpa [#allocation9], 0
    %17 = vsyncpa [#allocation4], 0
    %s18 = scalar_lea.sflag [#allocation4], 1
    %19 = vsyncpa %s18, 0
    loop: start=0, step=1, limit=4
    $region2: #{tpu_custom_call.1} parent=1 // loop_pre_header
      _
    $region3: #{tpu_custom_call.1} parent=1 // loop_header
      %s21 = sphi 0, %s25
      %p22 = scmp.ge.s32.totalorder %s21, 4
      %s31 = sphi 0, %s33
      %s34 = sphi 0, %s31
      %s35 = sphi 0, %s34
      %s51 = sphi 0, %s35
      %s55 = sphi 0, %s55
      %s57 = sphi 0, %s55
      %s58 = sphi 0, %s57
      %s72 = sphi 0, %s58
      %s76 = sphi 0, %s76
      %s78 = sphi 0, %s76
      %s79 = sphi 0, %s78
      %s93 = sphi 0, %s79
      %s97 = sphi 0, %s97
      %s99 = sphi 0, %s97
      %s100 = sphi 0, %s99
      %s114 = sphi 0, %s100
      %s118 = sphi 0, %s118
      %s120 = sphi 0, %s118
      %s121 = sphi 0, %s120
      %s135 = sphi 0, %s121
      %s139 = sphi 0, %s139
      %s141 = sphi 0, %s139
      %s142 = sphi 0, %s141
      %s156 = sphi 0, %s142
      %s160 = sphi 0, %s160
      %s162 = sphi 0, %s160
      %s163 = sphi 0, %s162
      %s177 = sphi 0, %s163
      %s183 = sphi 0, %s185
      %s186 = sphi 0, %s183
      %s187 = sphi 0, %s186
      %s203 = sphi 0, %s187
    $region4: #{tpu_custom_call.1} parent=1 // loop_header_branch
      %24 = sbr.rel (%p22) target = $region8
    $region5: #{tpu_custom_call.1} parent=1 // loop_body
      %s26 = ssub.s32 %s21, 1
      %s27 = ssub.s32 %s21, 2
      %s28 = sadd.s32 %s21, 1
      %s29 = ssub.s32 %s21, %s28
      %p30 = scmp.eq.s32.totalorder %s29, 0
      %s32 = sadd.s32 %s31, 1
      %s33 = scalar_select %p30, %s31, %s32
      %p36 = pneg %p30
      %p37 = scmp.eq.s32.totalorder %s21, 1
      %p38 = por %p36, %p37
      %p39 = scmp.ne.s32.totalorder %s31, %s34
      %p40 = scmp.eq.s32.totalorder %s21, 0
      %p41 = por %p39, %p40
      %p42 = scmp.ne.s32.totalorder %s31, %s34
      %p43 = scmp.eq.s32.totalorder %s26, 1
      %p44 = por %p42, %p43
      %p45 = scmp.ne.s32.totalorder %s34, %s35
      %p46 = scmp.eq.s32.totalorder %s26, 0
      %p47 = por %p45, %p46
      %p48 = scmp.ne.s32.totalorder %s34, %s35
      %p49 = scmp.eq.s32.totalorder %s27, 1
      %p50 = por %p48, %p49
      %p52 = scmp.ne.s32.totalorder %s35, %s51
      %p53 = scmp.eq.s32.totalorder %s27, 0
      %p54 = por %p52, %p53
      %s56 = sadd.s32 %s55, 1
      %p59 = scmp.eq.s32.totalorder %s21, 1
      %p60 = scmp.ne.s32.totalorder %s55, %s57
      %p61 = scmp.eq.s32.totalorder %s21, 0
      %p62 = por %p60, %p61
      %p63 = scmp.ne.s32.totalorder %s55, %s57
      %p64 = scmp.eq.s32.totalorder %s26, 1
      %p65 = por %p63, %p64
      %p66 = scmp.ne.s32.totalorder %s57, %s58
      %p67 = scmp.eq.s32.totalorder %s26, 0
      %p68 = por %p66, %p67
      %p69 = scmp.ne.s32.totalorder %s57, %s58
      %p70 = scmp.eq.s32.totalorder %s27, 1
      %p71 = por %p69, %p70
      %p73 = scmp.ne.s32.totalorder %s58, %s72
      %p74 = scmp.eq.s32.totalorder %s27, 0
      %p75 = por %p73, %p74
      %s77 = sadd.s32 %s76, 1
      %p80 = scmp.eq.s32.totalorder %s21, 1
      %p81 = scmp.ne.s32.totalorder %s76, %s78
      %p82 = scmp.eq.s32.totalorder %s21, 0
      %p83 = por %p81, %p82
      %p84 = scmp.ne.s32.totalorder %s76, %s78
      %p85 = scmp.eq.s32.totalorder %s26, 1
      %p86 = por %p84, %p85
      %p87 = scmp.ne.s32.totalorder %s78, %s79
      %p88 = scmp.eq.s32.totalorder %s26, 0
      %p89 = por %p87, %p88
      %p90 = scmp.ne.s32.totalorder %s78, %s79
      %p91 = scmp.eq.s32.totalorder %s27, 1
      %p92 = por %p90, %p91
      %p94 = scmp.ne.s32.totalorder %s79, %s93
      %p95 = scmp.eq.s32.totalorder %s27, 0
      %p96 = por %p94, %p95
      %s98 = sadd.s32 %s97, 1
      %p101 = scmp.eq.s32.totalorder %s21, 1
      %p102 = scmp.ne.s32.totalorder %s97, %s99
      %p103 = scmp.eq.s32.totalorder %s21, 0
      %p104 = por %p102, %p103
      %p105 = scmp.ne.s32.totalorder %s97, %s99
      %p106 = scmp.eq.s32.totalorder %s26, 1
      %p107 = por %p105, %p106
      %p108 = scmp.ne.s32.totalorder %s99, %s100
      %p109 = scmp.eq.s32.totalorder %s26, 0
      %p110 = por %p108, %p109
      %p111 = scmp.ne.s32.totalorder %s99, %s100
      %p112 = scmp.eq.s32.totalorder %s27, 1
      %p113 = por %p111, %p112
      %p115 = scmp.ne.s32.totalorder %s100, %s114
      %p116 = scmp.eq.s32.totalorder %s27, 0
      %p117 = por %p115, %p116
      %s119 = sadd.s32 %s118, 1
      %p122 = scmp.eq.s32.totalorder %s21, 1
      %p123 = scmp.ne.s32.totalorder %s118, %s120
      %p124 = scmp.eq.s32.totalorder %s21, 0
      %p125 = por %p123, %p124
      %p126 = scmp.ne.s32.totalorder %s118, %s120
      %p127 = scmp.eq.s32.totalorder %s26, 1
      %p128 = por %p126, %p127
      %p129 = scmp.ne.s32.totalorder %s120, %s121
      %p130 = scmp.eq.s32.totalorder %s26, 0
      %p131 = por %p129, %p130
      %p132 = scmp.ne.s32.totalorder %s120, %s121
      %p133 = scmp.eq.s32.totalorder %s27, 1
      %p134 = por %p132, %p133
      %p136 = scmp.ne.s32.totalorder %s121, %s135
      %p137 = scmp.eq.s32.totalorder %s27, 0
      %p138 = por %p136, %p137
      %s140 = sadd.s32 %s139, 1
      %p143 = scmp.eq.s32.totalorder %s21, 1
      %p144 = scmp.ne.s32.totalorder %s139, %s141
      %p145 = scmp.eq.s32.totalorder %s21, 0
      %p146 = por %p144, %p145
      %p147 = scmp.ne.s32.totalorder %s139, %s141
      %p148 = scmp.eq.s32.totalorder %s26, 1
      %p149 = por %p147, %p148
      %p150 = scmp.ne.s32.totalorder %s141, %s142
      %p151 = scmp.eq.s32.totalorder %s26, 0
      %p152 = por %p150, %p151
      %p153 = scmp.ne.s32.totalorder %s141, %s142
      %p154 = scmp.eq.s32.totalorder %s27, 1
      %p155 = por %p153, %p154
      %p157 = scmp.ne.s32.totalorder %s142, %s156
      %p158 = scmp.eq.s32.totalorder %s27, 0
      %p159 = por %p157, %p158
      %s161 = sadd.s32 %s160, 1
      %p164 = scmp.eq.s32.totalorder %s21, 1
      %p165 = scmp.ne.s32.totalorder %s160, %s162
      %p166 = scmp.eq.s32.totalorder %s21, 0
      %p167 = por %p165, %p166
      %p168 = scmp.ne.s32.totalorder %s160, %s162
      %p169 = scmp.eq.s32.totalorder %s26, 1
      %p170 = por %p168, %p169
      %p171 = scmp.ne.s32.totalorder %s162, %s163
      %p172 = scmp.eq.s32.totalorder %s26, 0
      %p173 = por %p171, %p172
      %p174 = scmp.ne.s32.totalorder %s162, %s163
      %p175 = scmp.eq.s32.totalorder %s27, 1
      %p176 = por %p174, %p175
      %p178 = scmp.ne.s32.totalorder %s163, %s177
      %p179 = scmp.eq.s32.totalorder %s27, 0
      %p180 = por %p178, %p179
      %s181 = ssub.s32 %s21, %s28
      %p182 = scmp.eq.s32.totalorder %s181, 0
      %s184 = sadd.s32 %s183, 1
      %s185 = scalar_select %p182, %s183, %s184
      %p188 = pneg %p182
      %p189 = scmp.eq.s32.totalorder %s21, 1
      %p190 = por %p188, %p189
      %p191 = scmp.ne.s32.totalorder %s183, %s186
      %p192 = scmp.eq.s32.totalorder %s21, 0
      %p193 = por %p191, %p192
      %p194 = scmp.ne.s32.totalorder %s183, %s186
      %p195 = scmp.eq.s32.totalorder %s26, 1
      %p196 = por %p194, %p195
      %p197 = scmp.ne.s32.totalorder %s186, %s187
      %p198 = scmp.eq.s32.totalorder %s26, 0
      %p199 = por %p197, %p198
      %p200 = scmp.ne.s32.totalorder %s186, %s187
      %p201 = scmp.eq.s32.totalorder %s27, 1
      %p202 = por %p200, %p201
      %p204 = scmp.ne.s32.totalorder %s187, %s203
      %p205 = scmp.eq.s32.totalorder %s27, 0
      %p206 = por %p204, %p205
      %p207 = scmp.le.s32.totalorder 1, %s21
      %p208 = scmp.lt.s32.totalorder %s21, 3
      %p209 = pnand %p207, %p208
      %p210 = pneg %p209
      // Predicated region
      $region9: #{tpu_custom_call.1} parent=5 // pred_check
        _
      $region10: #{tpu_custom_call.1} parent=5 // pred_check_branch
        %212 = sbr.rel (%p209) target = $region12
      $region11: #{tpu_custom_call.1} parent=5 // pred_region
        %s213 = ssub.s32 %s21, 1
        // Predicated region
        $region13: #{tpu_custom_call.1} parent=11 // pred_check
          %p214 = pneg %p68
        $region14: #{tpu_custom_call.1} parent=11 // pred_check_branch
          %216 = sbr.rel (%p214) target = $region16
        $region15: #{tpu_custom_call.1} parent=11 // pred_region
          %s218 = ssub.s32 576, 576
          %219 = vsyncadd [#allocation6], %s218
          %s220 = sshll.u32 [#allocation5], 4
          %s221 = int_to_ptr.vmem [resolvable:$true] %s220
          %226 = dma.hbm_to_vmem [thread:$0]  %s1, 576, %s221, [#allocation6], 64, 64, 4
        $region16: #{tpu_custom_call.1} parent=11 // pred_fallthru
          _
        // Predicated region
        $region17: #{tpu_custom_call.1} parent=11 // pred_check
          %p227 = pneg %p89
        $region18: #{tpu_custom_call.1} parent=11 // pred_check_branch
          %229 = sbr.rel (%p227) target = $region20
        $region19: #{tpu_custom_call.1} parent=11 // pred_region
          _
        $region20: #{tpu_custom_call.1} parent=11 // pred_fallthru
          _
        // Predicated region
        $region21: #{tpu_custom_call.1} parent=11 // pred_check
          %p230 = pneg %p110
        $region22: #{tpu_custom_call.1} parent=11 // pred_check_branch
          %232 = sbr.rel (%p230) target = $region24
        $region23: #{tpu_custom_call.1} parent=11 // pred_region
          %s234 = ssub.s32 1024, 1024
          %235 = vsyncadd [#allocation6], %s234
          %s236 = sshll.u32 [#allocation7], 4
          %s237 = int_to_ptr.vmem [resolvable:$true] %s236
          %242 = dma.hbm_to_vmem [thread:$0]  %s3, 1024, %s237, [#allocation6], 64, 64, 4
        $region24: #{tpu_custom_call.1} parent=11 // pred_fallthru
          _
        // Predicated region
        $region25: #{tpu_custom_call.1} parent=11 // pred_check
          %p243 = pneg %p131
        $region26: #{tpu_custom_call.1} parent=11 // pred_check_branch
          %245 = sbr.rel (%p243) target = $region28
        $region27: #{tpu_custom_call.1} parent=11 // pred_region
          _
        $region28: #{tpu_custom_call.1} parent=11 // pred_fallthru
          _
        // Predicated region
        $region29: #{tpu_custom_call.1} parent=11 // pred_check
          %p246 = pneg %p152
        $region30: #{tpu_custom_call.1} parent=11 // pred_check_branch
          %248 = sbr.rel (%p246) target = $region32
        $region31: #{tpu_custom_call.1} parent=11 // pred_region
          %s250 = ssub.s32 1024, 1024
          %251 = vsyncadd [#allocation9], %s250
          %s252 = sshll.u32 [#allocation8], 4
          %s253 = int_to_ptr.vmem [resolvable:$true] %s252
          %258 = dma.hbm_to_vmem [thread:$0]  %s5, 1024, %s253, [#allocation9], 64, 64, 4
        $region32: #{tpu_custom_call.1} parent=11 // pred_fallthru
          _
        // Predicated region
        $region33: #{tpu_custom_call.1} parent=11 // pred_check
          %p259 = pneg %p173
        $region34: #{tpu_custom_call.1} parent=11 // pred_check_branch
          %261 = sbr.rel (%p259) target = $region36
        $region35: #{tpu_custom_call.1} parent=11 // pred_region
          _
        $region36: #{tpu_custom_call.1} parent=11 // pred_fallthru
          _
      $region12: #{tpu_custom_call.1} parent=5 // pred_fallthru
        _
      %p262 = scmp.lt.s32.totalorder %s21, 2
      // Predicated region
      $region37: #{tpu_custom_call.1} parent=5 // pred_check
        %p263 = pneg %p262
      $region38: #{tpu_custom_call.1} parent=5 // pred_check_branch
        %265 = sbr.rel (%p263) target = $region40
      $region39: #{tpu_custom_call.1} parent=5 // pred_region
        // Predicated region
        $region41: #{tpu_custom_call.1} parent=39 // pred_check
          %p266 = pneg %p41
        $region42: #{tpu_custom_call.1} parent=39 // pred_check_branch
          %268 = sbr.rel (%p266) target = $region44
        $region43: #{tpu_custom_call.1} parent=39 // pred_region
          %s269 = sand.u32 %s31, 1
          %s270 = scalar_lea.sflag [#allocation3], %s269
          %s271 = sand.u32 %s31, 1
          %s272 = smul.addr %s271, 160
          %s273 = scalar_lea.vmem [#allocation2], %s272
          %s275 = ssub.s32 2560, 2560
          %276 = vsyncadd %s270, %s275
          %s277 = smul.addr %s21, 40
          %s278 = smul.addr %s277, 64
          %s279 = scalar_lea.hbm %s0, %s278
          %s280 = sshll.u32 %s273, 4
          %s281 = int_to_ptr.vmem [resolvable:$true] %s280
          %286 = dma.hbm_to_vmem [thread:$0]  %s279, 2560, %s281, %s270, 64, 64, 4
        $region44: #{tpu_custom_call.1} parent=39 // pred_fallthru
          _
      $region40: #{tpu_custom_call.1} parent=5 // pred_fallthru
        _
      %p287 = scmp.le.s32.totalorder 1, %s21
      %p288 = scmp.lt.s32.totalorder %s21, 3
      %p289 = pnand %p287, %p288
      %p290 = pneg %p289
      // Predicated region
      $region45: #{tpu_custom_call.1} parent=5 // pred_check
        _
      $region46: #{tpu_custom_call.1} parent=5 // pred_check_branch
        %292 = sbr.rel (%p289) target = $region48
      $region47: #{tpu_custom_call.1} parent=5 // pred_region
        %s293 = ssub.s32 %s21, 1
        %s294 = sand.u32 %s34, 1
        %s295 = scalar_lea.sflag [#allocation3], %s294
        %s296 = sand.u32 %s34, 1
        %s297 = smul.addr %s296, 160
        %s298 = scalar_lea.vmem [#allocation2], %s297
        // Predicated region
        $region49: #{tpu_custom_call.1} parent=47 // pred_check
          %p299 = pneg %p47
        $region50: #{tpu_custom_call.1} parent=47 // pred_check_branch
          %301 = sbr.rel (%p299) target = $region52
        $region51: #{tpu_custom_call.1} parent=47 // pred_region
          %302 = dma.done %s295, 2560
        $region52: #{tpu_custom_call.1} parent=47 // pred_fallthru
          _
        // Predicated region
        $region53: #{tpu_custom_call.1} parent=47 // pred_check
          %p303 = pneg %p68
        $region54: #{tpu_custom_call.1} parent=47 // pred_check_branch
          %305 = sbr.rel (%p303) target = $region56
        $region55: #{tpu_custom_call.1} parent=47 // pred_region
          %306 = dma.done [#allocation6], 576
        $region56: #{tpu_custom_call.1} parent=47 // pred_fallthru
          _
        // Predicated region
        $region57: #{tpu_custom_call.1} parent=47 // pred_check
          %p307 = pneg %p110
        $region58: #{tpu_custom_call.1} parent=47 // pred_check_branch
          %309 = sbr.rel (%p307) target = $region60
        $region59: #{tpu_custom_call.1} parent=47 // pred_region
          %310 = dma.done [#allocation6], 1024
        $region60: #{tpu_custom_call.1} parent=47 // pred_fallthru
          _
        // Predicated region
        $region61: #{tpu_custom_call.1} parent=47 // pred_check
          %p311 = pneg %p152
        $region62: #{tpu_custom_call.1} parent=47 // pred_check_branch
          %313 = sbr.rel (%p311) target = $region64
        $region63: #{tpu_custom_call.1} parent=47 // pred_region
          %314 = dma.done [#allocation9], 1024
        $region64: #{tpu_custom_call.1} parent=47 // pred_fallthru
          _
        %s315 = sand.u32 %s34, 1
        %s316 = scalar_lea.sflag [#allocation3], %s315
        %s317 = sand.u32 %s34, 1
        %s318 = smul.addr %s317, 160
        %s319 = scalar_lea.vmem [#allocation2], %s318
        %p320 = pneg %p47
        %p321 = pneg %p44
        %p322 = pneg %p68
        %p323 = pneg %p65
        %p324 = pneg %p89
        %p325 = pneg %p86
        %p326 = pneg %p110
        %p327 = pneg %p107
        %p328 = pneg %p131
        %p329 = pneg %p128
        %p330 = pneg %p152
        %p331 = pneg %p149
        %p332 = pneg %p173
        %p333 = pneg %p170
        %p334 = pneg %p199
        %p335 = pneg %p196
        %s336 = sand.u32 %s186, 1
        %s337 = scalar_lea.sflag [#allocation4], %s336
        %s338 = sand.u32 %s186, 1
        %s339 = smul.addr %s338, 16
        %s340 = scalar_lea.vmem [#allocation10], %s339
        %v342 = vld [vmem:[%s2] sm:$0x1]
        %v344 = vlaneseq
        %v345 = vshrl.u32 %v344, 7
        %v346 = vsub.s32 0, %v345
        %v347 = vrot.slane %v342, %v346
        %v349 = vld [vmem:[%s298] sm:$0xf]
        %v350 = vld [vmem:[%s298 + $0x4] sm:$0xf]
        %v351 = vld [vmem:[%s298 + $0x8] sm:$0xf]
        %v352 = vld [vmem:[%s298 + $0xc] sm:$0xf]
        %v353 = vld [vmem:[%s298 + $0x10] sm:$0xf]
        %v354 = vld [vmem:[%s298 + $0x14] sm:$0xf]
        %v355 = vld [vmem:[%s298 + $0x18] sm:$0xf]
        %v356 = vld [vmem:[%s298 + $0x1c] sm:$0xf]
        %v357 = vld [vmem:[%s298 + $0x20] sm:$0xf]
        %v358 = vld [vmem:[%s298 + $0x24] sm:$0xf]
        %v359 = vld [vmem:[%s298 + $0x28] sm:$0xf]
        %v360 = vld [vmem:[%s298 + $0x2c] sm:$0xf]
        %v361 = vld [vmem:[%s298 + $0x30] sm:$0xf]
        %v362 = vld [vmem:[%s298 + $0x34] sm:$0xf]
        %v363 = vld [vmem:[%s298 + $0x38] sm:$0xf]
        %v364 = vld [vmem:[%s298 + $0x3c] sm:$0xf]
        %v365 = vld [vmem:[%s298 + $0x40] sm:$0xf]
        %v366 = vld [vmem:[%s298 + $0x44] sm:$0xf]
        %v367 = vld [vmem:[%s298 + $0x48] sm:$0xf]
        %v368 = vld [vmem:[%s298 + $0x4c] sm:$0xf]
        %v369 = vld [vmem:[%s298 + $0x50] sm:$0xf]
        %v370 = vld [vmem:[%s298 + $0x54] sm:$0xf]
        %v371 = vld [vmem:[%s298 + $0x58] sm:$0xf]
        %v372 = vld [vmem:[%s298 + $0x5c] sm:$0xf]
        %v373 = vld [vmem:[%s298 + $0x60] sm:$0xf]
        %v374 = vld [vmem:[%s298 + $0x64] sm:$0xf]
        %v375 = vld [vmem:[%s298 + $0x68] sm:$0xf]
        %v376 = vld [vmem:[%s298 + $0x6c] sm:$0xf]
        %v377 = vld [vmem:[%s298 + $0x70] sm:$0xf]
        %v378 = vld [vmem:[%s298 + $0x74] sm:$0xf]
        %v379 = vld [vmem:[%s298 + $0x78] sm:$0xf]
        %v380 = vld [vmem:[%s298 + $0x7c] sm:$0xf]
        %v381 = vld [vmem:[#allocation5] sm:$0xf]
        %v382 = vld [vmem:[#allocation5 + $0x4] sm:$0xf]
        %v383 = vld [vmem:[#allocation5 + $0x8] sm:$0xf]
        %v416 = vunpack.c.l.b16 %v349
        %v417 = vunpack.c.l.b16 %v350
        %v418 = vunpack.c.l.b16 %v351
        %v419 = vunpack.c.l.b16 %v352
        %v420 = vunpack.c.l.b16 %v353
        %v421 = vunpack.c.l.b16 %v354
        %v422 = vunpack.c.l.b16 %v355
        %v423 = vunpack.c.l.b16 %v356
        %v424 = vunpack.c.l.b16 %v357
        %v425 = vunpack.c.l.b16 %v358
        %v426 = vunpack.c.l.b16 %v359
        %v427 = vunpack.c.l.b16 %v360
        %v428 = vunpack.c.l.b16 %v361
        %v429 = vunpack.c.l.b16 %v362
        %v430 = vunpack.c.l.b16 %v363
        %v431 = vunpack.c.l.b16 %v364
        %v432 = vunpack.c.l.b16 %v365
        %v433 = vunpack.c.l.b16 %v366
        %v434 = vunpack.c.l.b16 %v367
        %v435 = vunpack.c.l.b16 %v368
        %v436 = vunpack.c.l.b16 %v369
        %v437 = vunpack.c.l.b16 %v370
        %v438 = vunpack.c.l.b16 %v371
        %v439 = vunpack.c.l.b16 %v372
        %v440 = vunpack.c.l.b16 %v373
        %v441 = vunpack.c.l.b16 %v374
        %v442 = vunpack.c.l.b16 %v375
        %v443 = vunpack.c.l.b16 %v376
        %v444 = vunpack.c.l.b16 %v377
        %v445 = vunpack.c.l.b16 %v378
        %v446 = vunpack.c.l.b16 %v379
        %v447 = vunpack.c.l.b16 %v380
        %v448 = vpack.c.b16 %v417, %v416
        %v449 = vpack.c.b16 %v419, %v418
        %v450 = vpack.c.b16 %v421, %v420
        %v451 = vpack.c.b16 %v423, %v422
        %v452 = vpack.c.b16 %v425, %v424
        %v453 = vpack.c.b16 %v427, %v426
        %v454 = vpack.c.b16 %v429, %v428
        %v455 = vpack.c.b16 %v431, %v430
        %v456 = vpack.c.b16 %v433, %v432
        %v457 = vpack.c.b16 %v435, %v434
        %v458 = vpack.c.b16 %v437, %v436
        %v459 = vpack.c.b16 %v439, %v438
        %v460 = vpack.c.b16 %v441, %v440
        %v461 = vpack.c.b16 %v443, %v442
        %v462 = vpack.c.b16 %v445, %v444
        %v463 = vpack.c.b16 %v447, %v446
        %v467 = vunpack.c.l.b16 %v381
        %v468 = vunpack.c.l.b16 %v382
        %v469 = vunpack.c.l.b16 %v383
        %v470 = vpack.c.b16 %v468, %v467
        %v471 = vpack.c.b16 %v469, %v469
        %vm473 = vcmask 195584
        %v475 = vsel %vm473, %v448, 0
        %v478 = vsel %vm473, %v449, 0
        %v481 = vsel %vm473, %v450, 0
        %v484 = vsel %vm473, %v451, 0
        %v487 = vsel %vm473, %v452, 0
        %v490 = vsel %vm473, %v453, 0
        %v493 = vsel %vm473, %v454, 0
        %v496 = vsel %vm473, %v455, 0
        %v499 = vsel %vm473, %v456, 0
        %v502 = vsel %vm473, %v457, 0
        %v505 = vsel %vm473, %v458, 0
        %v508 = vsel %vm473, %v459, 0
        %v511 = vsel %vm473, %v460, 0
        %v514 = vsel %vm473, %v461, 0
        %v517 = vsel %vm473, %v462, 0
        %v520 = vsel %vm473, %v463, 0
        %vm522 = vcmask 1043456
        %v524 = vsel %vm522, %v471, 0
        %526 = vmatprep.subr.bf16.mxu0 0
        %527 = vmatpush1.bf16.msra.mxu0 0
        %528 = vmatprep.subr.bf16.mxu0 0
        %529 = vmatpush1.bf16.msra.mxu0 0
        %530 = vmatprep.subr.bf16.mxu0 0
        %531 = vmatpush1.bf16.msra.mxu0 0
        %532 = vmatprep.subr.bf16.mxu0 0
        %533 = vmatpush1.bf16.msra.mxu0 0
        %534 = vmatprep.subr.bf16.mxu0 0
        %535 = vmatpush1.bf16.msra.mxu0 0
        %536 = vmatprep.subr.bf16.mxu0 0
        %537 = vmatpush1.bf16.msra.mxu0 0
        %538 = vmatprep.subr.bf16.mxu0 0
        %539 = vmatpush1.bf16.msra.mxu0 %v524
        %540 = vmatprep.subr.bf16.mxu0 0
        %541 = vmatpush1.bf16.msra.mxu0 %v470
        %542 = vmatprep.subr.bf16.mxu0 0
        %543 = vmatpush2.bf16.msra.mxu0 0
        %544 = vmatprep.subr.bf16.mxu0 0
        %545 = vmatpush2.bf16.msra.mxu0 0
        %546 = vmatprep.subr.bf16.mxu0 0
        %547 = vmatpush2.bf16.msra.mxu0 0
        %548 = vmatprep.subr.bf16.mxu0 0
        %549 = vmatpush2.bf16.msra.mxu0 0
        %550 = vmatprep.subr.bf16.mxu0 0
        %551 = vmatpush2.bf16.msra.mxu0 0
        %552 = vmatprep.subr.bf16.mxu0 0
        %553 = vmatpush2.bf16.msra.mxu0 0
        %554 = vmatprep.subr.bf16.mxu0 0
        %555 = vmatpush2.bf16.msra.mxu0 0
        %556 = vmatprep.subr.bf16.mxu0 0
        %557 = vmatpush2.bf16.msra.mxu0 0
        %558 = vmatprep.mubr.bf16.mxu0 0
        %559 = vmatmul.mubr.bf16.gmra.mxu0 %v475
        %v560 = vpop.f32.mrf.mxu0
        %v561 = vadd.f32 0.0, %v560
        %v562 = vpop.f32.mrf.mxu0
        %v563 = vpop.f32.mrf.mxu0
        %v564 = vadd.f32 0.0, %v563
        %v565 = vpop.f32.mrf.mxu0
        %566 = vmatprep.mubr.bf16.mxu0 0
        %567 = vmatmul.mubr.bf16.gmra.mxu0 %v478
        %v568 = vpop.f32.mrf.mxu0
        %v569 = vadd.f32 0.0, %v568
        %v570 = vpop.f32.mrf.mxu0
        %v571 = vpop.f32.mrf.mxu0
        %v572 = vadd.f32 0.0, %v571
        %v573 = vpop.f32.mrf.mxu0
        %574 = vmatprep.mubr.bf16.mxu0 0
        %575 = vmatmul.mubr.bf16.gmra.mxu0 %v481
        %v576 = vpop.f32.mrf.mxu0
        %v577 = vadd.f32 0.0, %v576
        %v578 = vpop.f32.mrf.mxu0
        %v579 = vpop.f32.mrf.mxu0
        %v580 = vadd.f32 0.0, %v579
        %v581 = vpop.f32.mrf.mxu0
        %582 = vmatprep.mubr.bf16.mxu0 0
        %583 = vmatmul.mubr.bf16.gmra.mxu0 %v484
        %v584 = vpop.f32.mrf.mxu0
        %v585 = vadd.f32 0.0, %v584
        %v586 = vpop.f32.mrf.mxu0
        %v587 = vpop.f32.mrf.mxu0
        %v588 = vadd.f32 0.0, %v587
        %v589 = vpop.f32.mrf.mxu0
        %590 = vmatprep.mubr.bf16.mxu0 0
        %591 = vmatmul.mubr.bf16.gmra.mxu0 %v487
        %v592 = vpop.f32.mrf.mxu0
        %v593 = vadd.f32 0.0, %v592
        %v594 = vpop.f32.mrf.mxu0
        %v595 = vpop.f32.mrf.mxu0
        %v596 = vadd.f32 0.0, %v595
        %v597 = vpop.f32.mrf.mxu0
        %598 = vmatprep.mubr.bf16.mxu0 0
        %599 = vmatmul.mubr.bf16.gmra.mxu0 %v490
        %v600 = vpop.f32.mrf.mxu0
        %v601 = vadd.f32 0.0, %v600
        %v602 = vpop.f32.mrf.mxu0
        %v603 = vpop.f32.mrf.mxu0
        %v604 = vadd.f32 0.0, %v603
        %v605 = vpop.f32.mrf.mxu0
        %606 = vmatprep.mubr.bf16.mxu0 0
        %607 = vmatmul.mubr.bf16.gmra.mxu0 %v493
        %v608 = vpop.f32.mrf.mxu0
        %v609 = vadd.f32 0.0, %v608
        %v610 = vpop.f32.mrf.mxu0
        %v611 = vpop.f32.mrf.mxu0
        %v612 = vadd.f32 0.0, %v611
        %v613 = vpop.f32.mrf.mxu0
        %614 = vmatprep.mubr.bf16.mxu0 0
        %615 = vmatmul.mubr.bf16.gmra.mxu0 %v496
        %v616 = vpop.f32.mrf.mxu0
        %v617 = vadd.f32 0.0, %v616
        %v618 = vpop.f32.mrf.mxu0
        %v619 = vpop.f32.mrf.mxu0
        %v620 = vadd.f32 0.0, %v619
        %v621 = vpop.f32.mrf.mxu0
        %622 = vmatprep.mubr.bf16.mxu0 0
        %623 = vmatmul.mubr.bf16.gmra.mxu0 %v499
        %v624 = vpop.f32.mrf.mxu0
        %v625 = vadd.f32 0.0, %v624
        %v626 = vpop.f32.mrf.mxu0
        %v627 = vpop.f32.mrf.mxu0
        %v628 = vadd.f32 0.0, %v627
        %v629 = vpop.f32.mrf.mxu0
        %630 = vmatprep.mubr.bf16.mxu0 0
        %631 = vmatmul.mubr.bf16.gmra.mxu0 %v502
        %v632 = vpop.f32.mrf.mxu0
        %v633 = vadd.f32 0.0, %v632
        %v634 = vpop.f32.mrf.mxu0
        %v635 = vpop.f32.mrf.mxu0
        %v636 = vadd.f32 0.0, %v635
        %v637 = vpop.f32.mrf.mxu0
        %638 = vmatprep.mubr.bf16.mxu0 0
        %639 = vmatmul.mubr.bf16.gmra.mxu0 %v505
        %v640 = vpop.f32.mrf.mxu0
        %v641 = vadd.f32 0.0, %v640
        %v642 = vpop.f32.mrf.mxu0
        %v643 = vpop.f32.mrf.mxu0
        %v644 = vadd.f32 0.0, %v643
        %v645 = vpop.f32.mrf.mxu0
        %646 = vmatprep.mubr.bf16.mxu0 0
        %647 = vmatmul.mubr.bf16.gmra.mxu0 %v508
        %v648 = vpop.f32.mrf.mxu0
        %v649 = vadd.f32 0.0, %v648
        %v650 = vpop.f32.mrf.mxu0
        %v651 = vpop.f32.mrf.mxu0
        %v652 = vadd.f32 0.0, %v651
        %v653 = vpop.f32.mrf.mxu0
        %654 = vmatprep.mubr.bf16.mxu0 0
        %655 = vmatmul.mubr.bf16.gmra.mxu0 %v511
        %v656 = vpop.f32.mrf.mxu0
        %v657 = vadd.f32 0.0, %v656
        %v658 = vpop.f32.mrf.mxu0
        %v659 = vpop.f32.mrf.mxu0
        %v660 = vadd.f32 0.0, %v659
        %v661 = vpop.f32.mrf.mxu0
        %662 = vmatprep.mubr.bf16.mxu0 0
        %663 = vmatmul.mubr.bf16.gmra.mxu0 %v514
        %v664 = vpop.f32.mrf.mxu0
        %v665 = vadd.f32 0.0, %v664
        %v666 = vpop.f32.mrf.mxu0
        %v667 = vpop.f32.mrf.mxu0
        %v668 = vadd.f32 0.0, %v667
        %v669 = vpop.f32.mrf.mxu0
        %670 = vmatprep.mubr.bf16.mxu0 0
        %671 = vmatmul.mubr.bf16.gmra.mxu0 %v517
        %v672 = vpop.f32.mrf.mxu0
        %v673 = vadd.f32 0.0, %v672
        %v674 = vpop.f32.mrf.mxu0
        %v675 = vpop.f32.mrf.mxu0
        %v676 = vadd.f32 0.0, %v675
        %v677 = vpop.f32.mrf.mxu0
        %678 = vmatprep.mubr.bf16.mxu0 0
        %679 = vmatmul.mubr.bf16.gmra.mxu0 %v520
        %v680 = vpop.f32.mrf.mxu0
        %v681 = vadd.f32 0.0, %v680
        %v682 = vpop.f32.mrf.mxu0
        %v683 = vpop.f32.mrf.mxu0
        %v684 = vadd.f32 0.0, %v683
        %v685 = vpop.f32.mrf.mxu0
        %686 = vdwg.mxu0
        %v687 = vadd.f32 %v347, %v561
        %v688 = vadd.f32 %v347, %v564
        %v689 = vadd.f32 %v347, %v569
        %v690 = vadd.f32 %v347, %v572
        %v691 = vadd.f32 %v347, %v577
        %v692 = vadd.f32 %v347, %v580
        %v693 = vadd.f32 %v347, %v585
        %v694 = vadd.f32 %v347, %v588
        %v695 = vadd.f32 %v347, %v593
        %v696 = vadd.f32 %v347, %v596
        %v697 = vadd.f32 %v347, %v601
        %v698 = vadd.f32 %v347, %v604
        %v699 = vadd.f32 %v347, %v609
        %v700 = vadd.f32 %v347, %v612
        %v701 = vadd.f32 %v347, %v617
        %v702 = vadd.f32 %v347, %v620
        %v703 = vadd.f32 %v347, %v625
        %v704 = vadd.f32 %v347, %v628
        %v705 = vadd.f32 %v347, %v633
        %v706 = vadd.f32 %v347, %v636
        %v707 = vadd.f32 %v347, %v641
        %v708 = vadd.f32 %v347, %v644
        %v709 = vadd.f32 %v347, %v649
        %v710 = vadd.f32 %v347, %v652
        %v711 = vadd.f32 %v347, %v657
        %v712 = vadd.f32 %v347, %v660
        %v713 = vadd.f32 %v347, %v665
        %v714 = vadd.f32 %v347, %v668
        %v715 = vadd.f32 %v347, %v673
        %v716 = vadd.f32 %v347, %v676
        %v717 = vadd.f32 %v347, %v681
        %v718 = vadd.f32 %v347, %v684
        %s719 = scalar_lea.vmem %s298, 16 [#allocation2]
        %v720 = vld [vmem:[%s719] sm:$0xf]
        %v721 = vld [vmem:[%s719 + $0x4] sm:$0xf]
        %v722 = vld [vmem:[%s719 + $0x8] sm:$0xf]
        %v723 = vld [vmem:[%s719 + $0xc] sm:$0xf]
        %v724 = vld [vmem:[%s719 + $0x10] sm:$0xf]
        %v725 = vld [vmem:[%s719 + $0x14] sm:$0xf]
        %v726 = vld [vmem:[%s719 + $0x18] sm:$0xf]
        %v727 = vld [vmem:[%s719 + $0x1c] sm:$0xf]
        %v728 = vld [vmem:[%s719 + $0x20] sm:$0xf]
        %v729 = vld [vmem:[%s719 + $0x24] sm:$0xf]
        %v730 = vld [vmem:[%s719 + $0x28] sm:$0xf]
        %v731 = vld [vmem:[%s719 + $0x2c] sm:$0xf]
        %v732 = vld [vmem:[%s719 + $0x30] sm:$0xf]
        %v733 = vld [vmem:[%s719 + $0x34] sm:$0xf]
        %v734 = vld [vmem:[%s719 + $0x38] sm:$0xf]
        %v735 = vld [vmem:[%s719 + $0x3c] sm:$0xf]
        %v736 = vld [vmem:[%s719 + $0x40] sm:$0xf]
        %v737 = vld [vmem:[%s719 + $0x44] sm:$0xf]
        %v738 = vld [vmem:[%s719 + $0x48] sm:$0xf]
        %v739 = vld [vmem:[%s719 + $0x4c] sm:$0xf]
        %v740 = vld [vmem:[%s719 + $0x50] sm:$0xf]
        %v741 = vld [vmem:[%s719 + $0x54] sm:$0xf]
        %v742 = vld [vmem:[%s719 + $0x58] sm:$0xf]
        %v743 = vld [vmem:[%s719 + $0x5c] sm:$0xf]
        %v744 = vld [vmem:[%s719 + $0x60] sm:$0xf]
        %v745 = vld [vmem:[%s719 + $0x64] sm:$0xf]
        %v746 = vld [vmem:[%s719 + $0x68] sm:$0xf]
        %v747 = vld [vmem:[%s719 + $0x6c] sm:$0xf]
        %v748 = vld [vmem:[%s719 + $0x70] sm:$0xf]
        %v749 = vld [vmem:[%s719 + $0x74] sm:$0xf]
        %v750 = vld [vmem:[%s719 + $0x78] sm:$0xf]
        %v751 = vld [vmem:[%s719 + $0x7c] sm:$0xf]
        %s752 = scalar_lea.vmem [#allocation5], 12
        %v753 = vld [vmem:[%s752] sm:$0xf]
        %v754 = vld [vmem:[%s752 + $0x4] sm:$0xf]
        %v755 = vld [vmem:[%s752 + $0x8] sm:$0xf]
        %v788 = vunpack.c.l.b16 %v720
        %v789 = vunpack.c.l.b16 %v721
        %v790 = vunpack.c.l.b16 %v722
        %v791 = vunpack.c.l.b16 %v723
        %v792 = vunpack.c.l.b16 %v724
        %v793 = vunpack.c.l.b16 %v725
        %v794 = vunpack.c.l.b16 %v726
        %v795 = vunpack.c.l.b16 %v727
        %v796 = vunpack.c.l.b16 %v728
        %v797 = vunpack.c.l.b16 %v729
        %v798 = vunpack.c.l.b16 %v730
        %v799 = vunpack.c.l.b16 %v731
        %v800 = vunpack.c.l.b16 %v732
        %v801 = vunpack.c.l.b16 %v733
        %v802 = vunpack.c.l.b16 %v734
        %v803 = vunpack.c.l.b16 %v735
        %v804 = vunpack.c.l.b16 %v736
        %v805 = vunpack.c.l.b16 %v737
        %v806 = vunpack.c.l.b16 %v738
        %v807 = vunpack.c.l.b16 %v739
        %v808 = vunpack.c.l.b16 %v740
        %v809 = vunpack.c.l.b16 %v741
        %v810 = vunpack.c.l.b16 %v742
        %v811 = vunpack.c.l.b16 %v743
        %v812 = vunpack.c.l.b16 %v744
        %v813 = vunpack.c.l.b16 %v745
        %v814 = vunpack.c.l.b16 %v746
        %v815 = vunpack.c.l.b16 %v747
        %v816 = vunpack.c.l.b16 %v748
        %v817 = vunpack.c.l.b16 %v749
        %v818 = vunpack.c.l.b16 %v750
        %v819 = vunpack.c.l.b16 %v751
        %v820 = vpack.c.b16 %v789, %v788
        %v821 = vpack.c.b16 %v791, %v790
        %v822 = vpack.c.b16 %v793, %v792
        %v823 = vpack.c.b16 %v795, %v794
        %v824 = vpack.c.b16 %v797, %v796
        %v825 = vpack.c.b16 %v799, %v798
        %v826 = vpack.c.b16 %v801, %v800
        %v827 = vpack.c.b16 %v803, %v802
        %v828 = vpack.c.b16 %v805, %v804
        %v829 = vpack.c.b16 %v807, %v806
        %v830 = vpack.c.b16 %v809, %v808
        %v831 = vpack.c.b16 %v811, %v810
        %v832 = vpack.c.b16 %v813, %v812
        %v833 = vpack.c.b16 %v815, %v814
        %v834 = vpack.c.b16 %v817, %v816
        %v835 = vpack.c.b16 %v819, %v818
        %v839 = vunpack.c.l.b16 %v753
        %v840 = vunpack.c.l.b16 %v754
        %v841 = vunpack.c.l.b16 %v755
        %v842 = vpack.c.b16 %v840, %v839
        %v843 = vpack.c.b16 %v841, %v841
        %v846 = vsel %vm473, %v820, 0
        %v849 = vsel %vm473, %v821, 0
        %v852 = vsel %vm473, %v822, 0
        %v855 = vsel %vm473, %v823, 0
        %v858 = vsel %vm473, %v824, 0
        %v861 = vsel %vm473, %v825, 0
        %v864 = vsel %vm473, %v826, 0
        %v867 = vsel %vm473, %v827, 0
        %v870 = vsel %vm473, %v828, 0
        %v873 = vsel %vm473, %v829, 0
        %v876 = vsel %vm473, %v830, 0
        %v879 = vsel %vm473, %v831, 0
        %v882 = vsel %vm473, %v832, 0
        %v885 = vsel %vm473, %v833, 0
        %v888 = vsel %vm473, %v834, 0
        %v891 = vsel %vm473, %v835, 0
        %v894 = vsel %vm522, %v843, 0
        %896 = vmatprep.subr.bf16.mxu0 0
        %897 = vmatpush1.bf16.msra.mxu0 0
        %898 = vmatprep.subr.bf16.mxu0 0
        %899 = vmatpush1.bf16.msra.mxu0 0
        %900 = vmatprep.subr.bf16.mxu0 0
        %901 = vmatpush1.bf16.msra.mxu0 0
        %902 = vmatprep.subr.bf16.mxu0 0
        %903 = vmatpush1.bf16.msra.mxu0 0
        %904 = vmatprep.subr.bf16.mxu0 0
        %905 = vmatpush1.bf16.msra.mxu0 0
        %906 = vmatprep.subr.bf16.mxu0 0
        %907 = vmatpush1.bf16.msra.mxu0 0
        %908 = vmatprep.subr.bf16.mxu0 0
        %909 = vmatpush1.bf16.msra.mxu0 %v894
        %910 = vmatprep.subr.bf16.mxu0 0
        %911 = vmatpush1.bf16.msra.mxu0 %v842
        %912 = vmatprep.subr.bf16.mxu0 0
        %913 = vmatpush2.bf16.msra.mxu0 0
        %914 = vmatprep.subr.bf16.mxu0 0
        %915 = vmatpush2.bf16.msra.mxu0 0
        %916 = vmatprep.subr.bf16.mxu0 0
        %917 = vmatpush2.bf16.msra.mxu0 0
        %918 = vmatprep.subr.bf16.mxu0 0
        %919 = vmatpush2.bf16.msra.mxu0 0
        %920 = vmatprep.subr.bf16.mxu0 0
        %921 = vmatpush2.bf16.msra.mxu0 0
        %922 = vmatprep.subr.bf16.mxu0 0
        %923 = vmatpush2.bf16.msra.mxu0 0
        %924 = vmatprep.subr.bf16.mxu0 0
        %925 = vmatpush2.bf16.msra.mxu0 0
        %926 = vmatprep.subr.bf16.mxu0 0
        %927 = vmatpush2.bf16.msra.mxu0 0
        %928 = vmatprep.mubr.bf16.mxu0 0
        %929 = vmatmul.mubr.bf16.gmra.mxu0 %v846
        %v930 = vpop.f32.mrf.mxu0
        %v931 = vadd.f32 0.0, %v930
        %v932 = vpop.f32.mrf.mxu0
        %v933 = vpop.f32.mrf.mxu0
        %v934 = vadd.f32 0.0, %v933
        %v935 = vpop.f32.mrf.mxu0
        %936 = vmatprep.mubr.bf16.mxu0 0
        %937 = vmatmul.mubr.bf16.gmra.mxu0 %v849
        %v938 = vpop.f32.mrf.mxu0
        %v939 = vadd.f32 0.0, %v938
        %v940 = vpop.f32.mrf.mxu0
        %v941 = vpop.f32.mrf.mxu0
        %v942 = vadd.f32 0.0, %v941
        %v943 = vpop.f32.mrf.mxu0
        %944 = vmatprep.mubr.bf16.mxu0 0
        %945 = vmatmul.mubr.bf16.gmra.mxu0 %v852
        %v946 = vpop.f32.mrf.mxu0
        %v947 = vadd.f32 0.0, %v946
        %v948 = vpop.f32.mrf.mxu0
        %v949 = vpop.f32.mrf.mxu0
        %v950 = vadd.f32 0.0, %v949
        %v951 = vpop.f32.mrf.mxu0
        %952 = vmatprep.mubr.bf16.mxu0 0
        %953 = vmatmul.mubr.bf16.gmra.mxu0 %v855
        %v954 = vpop.f32.mrf.mxu0
        %v955 = vadd.f32 0.0, %v954
        %v956 = vpop.f32.mrf.mxu0
        %v957 = vpop.f32.mrf.mxu0
        %v958 = vadd.f32 0.0, %v957
        %v959 = vpop.f32.mrf.mxu0
        %960 = vmatprep.mubr.bf16.mxu0 0
        %961 = vmatmul.mubr.bf16.gmra.mxu0 %v858
        %v962 = vpop.f32.mrf.mxu0
        %v963 = vadd.f32 0.0, %v962
        %v964 = vpop.f32.mrf.mxu0
        %v965 = vpop.f32.mrf.mxu0
        %v966 = vadd.f32 0.0, %v965
        %v967 = vpop.f32.mrf.mxu0
        %968 = vmatprep.mubr.bf16.mxu0 0
        %969 = vmatmul.mubr.bf16.gmra.mxu0 %v861
        %v970 = vpop.f32.mrf.mxu0
        %v971 = vadd.f32 0.0, %v970
        %v972 = vpop.f32.mrf.mxu0
        %v973 = vpop.f32.mrf.mxu0
        %v974 = vadd.f32 0.0, %v973
        %v975 = vpop.f32.mrf.mxu0
        %976 = vmatprep.mubr.bf16.mxu0 0
        %977 = vmatmul.mubr.bf16.gmra.mxu0 %v864
        %v978 = vpop.f32.mrf.mxu0
        %v979 = vadd.f32 0.0, %v978
        %v980 = vpop.f32.mrf.mxu0
        %v981 = vpop.f32.mrf.mxu0
        %v982 = vadd.f32 0.0, %v981
        %v983 = vpop.f32.mrf.mxu0
        %984 = vmatprep.mubr.bf16.mxu0 0
        %985 = vmatmul.mubr.bf16.gmra.mxu0 %v867
        %v986 = vpop.f32.mrf.mxu0
        %v987 = vadd.f32 0.0, %v986
        %v988 = vpop.f32.mrf.mxu0
        %v989 = vpop.f32.mrf.mxu0
        %v990 = vadd.f32 0.0, %v989
        %v991 = vpop.f32.mrf.mxu0
        %992 = vmatprep.mubr.bf16.mxu0 0
        %993 = vmatmul.mubr.bf16.gmra.mxu0 %v870
        %v994 = vpop.f32.mrf.mxu0
        %v995 = vadd.f32 0.0, %v994
        %v996 = vpop.f32.mrf.mxu0
        %v997 = vpop.f32.mrf.mxu0
        %v998 = vadd.f32 0.0, %v997
        %v999 = vpop.f32.mrf.mxu0
        %1000 = vmatprep.mubr.bf16.mxu0 0
        %1001 = vmatmul.mubr.bf16.gmra.mxu0 %v873
        %v1002 = vpop.f32.mrf.mxu0
        %v1003 = vadd.f32 0.0, %v1002
        %v1004 = vpop.f32.mrf.mxu0
        %v1005 = vpop.f32.mrf.mxu0
        %v1006 = vadd.f32 0.0, %v1005
        %v1007 = vpop.f32.mrf.mxu0
        %1008 = vmatprep.mubr.bf16.mxu0 0
        %1009 = vmatmul.mubr.bf16.gmra.mxu0 %v876
        %v1010 = vpop.f32.mrf.mxu0
        %v1011 = vadd.f32 0.0, %v1010
        %v1012 = vpop.f32.mrf.mxu0
        %v1013 = vpop.f32.mrf.mxu0
        %v1014 = vadd.f32 0.0, %v1013
        %v1015 = vpop.f32.mrf.mxu0
        %1016 = vmatprep.mubr.bf16.mxu0 0
        %1017 = vmatmul.mubr.bf16.gmra.mxu0 %v879
        %v1018 = vpop.f32.mrf.mxu0
        %v1019 = vadd.f32 0.0, %v1018
        %v1020 = vpop.f32.mrf.mxu0
        %v1021 = vpop.f32.mrf.mxu0
        %v1022 = vadd.f32 0.0, %v1021
        %v1023 = vpop.f32.mrf.mxu0
        %1024 = vmatprep.mubr.bf16.mxu0 0
        %1025 = vmatmul.mubr.bf16.gmra.mxu0 %v882
        %v1026 = vpop.f32.mrf.mxu0
        %v1027 = vadd.f32 0.0, %v1026
        %v1028 = vpop.f32.mrf.mxu0
        %v1029 = vpop.f32.mrf.mxu0
        %v1030 = vadd.f32 0.0, %v1029
        %v1031 = vpop.f32.mrf.mxu0
        %1032 = vmatprep.mubr.bf16.mxu0 0
        %1033 = vmatmul.mubr.bf16.gmra.mxu0 %v885
        %v1034 = vpop.f32.mrf.mxu0
        %v1035 = vadd.f32 0.0, %v1034
        %v1036 = vpop.f32.mrf.mxu0
        %v1037 = vpop.f32.mrf.mxu0
        %v1038 = vadd.f32 0.0, %v1037
        %v1039 = vpop.f32.mrf.mxu0
        %1040 = vmatprep.mubr.bf16.mxu0 0
        %1041 = vmatmul.mubr.bf16.gmra.mxu0 %v888
        %v1042 = vpop.f32.mrf.mxu0
        %v1043 = vadd.f32 0.0, %v1042
        %v1044 = vpop.f32.mrf.mxu0
        %v1045 = vpop.f32.mrf.mxu0
        %v1046 = vadd.f32 0.0, %v1045
        %v1047 = vpop.f32.mrf.mxu0
        %1048 = vmatprep.mubr.bf16.mxu0 0
        %1049 = vmatmul.mubr.bf16.gmra.mxu0 %v891
        %v1050 = vpop.f32.mrf.mxu0
        %v1051 = vadd.f32 0.0, %v1050
        %v1052 = vpop.f32.mrf.mxu0
        %v1053 = vpop.f32.mrf.mxu0
        %v1054 = vadd.f32 0.0, %v1053
        %v1055 = vpop.f32.mrf.mxu0
        %1056 = vdwg.mxu0
        %v1057 = vadd.f32 %v687, %v931
        %v1058 = vadd.f32 %v688, %v934
        %v1059 = vadd.f32 %v689, %v939
        %v1060 = vadd.f32 %v690, %v942
        %v1061 = vadd.f32 %v691, %v947
        %v1062 = vadd.f32 %v692, %v950
        %v1063 = vadd.f32 %v693, %v955
        %v1064 = vadd.f32 %v694, %v958
        %v1065 = vadd.f32 %v695, %v963
        %v1066 = vadd.f32 %v696, %v966
        %v1067 = vadd.f32 %v697, %v971
        %v1068 = vadd.f32 %v698, %v974
        %v1069 = vadd.f32 %v699, %v979
        %v1070 = vadd.f32 %v700, %v982
        %v1071 = vadd.f32 %v701, %v987
        %v1072 = vadd.f32 %v702, %v990
        %v1073 = vadd.f32 %v703, %v995
        %v1074 = vadd.f32 %v704, %v998
        %v1075 = vadd.f32 %v705, %v1003
        %v1076 = vadd.f32 %v706, %v1006
        %v1077 = vadd.f32 %v707, %v1011
        %v1078 = vadd.f32 %v708, %v1014
        %v1079 = vadd.f32 %v709, %v1019
        %v1080 = vadd.f32 %v710, %v1022
        %v1081 = vadd.f32 %v711, %v1027
        %v1082 = vadd.f32 %v712, %v1030
        %v1083 = vadd.f32 %v713, %v1035
        %v1084 = vadd.f32 %v714, %v1038
        %v1085 = vadd.f32 %v715, %v1043
        %v1086 = vadd.f32 %v716, %v1046
        %v1087 = vadd.f32 %v717, %v1051
        %v1088 = vadd.f32 %v718, %v1054
        %s1089 = scalar_lea.vmem %s298, 32 [#allocation2]
        %v1090 = vld [vmem:[%s1089] sm:$0xf]
        %v1091 = vld [vmem:[%s1089 + $0x4] sm:$0xf]
        %v1092 = vld [vmem:[%s1089 + $0x8] sm:$0xf]
        %v1093 = vld [vmem:[%s1089 + $0xc] sm:$0xf]
        %v1094 = vld [vmem:[%s1089 + $0x10] sm:$0xf]
        %v1095 = vld [vmem:[%s1089 + $0x14] sm:$0xf]
        %v1096 = vld [vmem:[%s1089 + $0x18] sm:$0xf]
        %v1097 = vld [vmem:[%s1089 + $0x1c] sm:$0xf]
        %v1098 = vld [vmem:[%s1089 + $0x20] sm:$0xf]
        %v1099 = vld [vmem:[%s1089 + $0x24] sm:$0xf]
        %v1100 = vld [vmem:[%s1089 + $0x28] sm:$0xf]
        %v1101 = vld [vmem:[%s1089 + $0x2c] sm:$0xf]
        %v1102 = vld [vmem:[%s1089 + $0x30] sm:$0xf]
        %v1103 = vld [vmem:[%s1089 + $0x34] sm:$0xf]
        %v1104 = vld [vmem:[%s1089 + $0x38] sm:$0xf]
        %v1105 = vld [vmem:[%s1089 + $0x3c] sm:$0xf]
        %v1106 = vld [vmem:[%s1089 + $0x40] sm:$0xf]
        %v1107 = vld [vmem:[%s1089 + $0x44] sm:$0xf]
        %v1108 = vld [vmem:[%s1089 + $0x48] sm:$0xf]
        %v1109 = vld [vmem:[%s1089 + $0x4c] sm:$0xf]
        %v1110 = vld [vmem:[%s1089 + $0x50] sm:$0xf]
        %v1111 = vld [vmem:[%s1089 + $0x54] sm:$0xf]
        %v1112 = vld [vmem:[%s1089 + $0x58] sm:$0xf]
        %v1113 = vld [vmem:[%s1089 + $0x5c] sm:$0xf]
        %v1114 = vld [vmem:[%s1089 + $0x60] sm:$0xf]
        %v1115 = vld [vmem:[%s1089 + $0x64] sm:$0xf]
        %v1116 = vld [vmem:[%s1089 + $0x68] sm:$0xf]
        %v1117 = vld [vmem:[%s1089 + $0x6c] sm:$0xf]
        %v1118 = vld [vmem:[%s1089 + $0x70] sm:$0xf]
        %v1119 = vld [vmem:[%s1089 + $0x74] sm:$0xf]
        %v1120 = vld [vmem:[%s1089 + $0x78] sm:$0xf]
        %v1121 = vld [vmem:[%s1089 + $0x7c] sm:$0xf]
        %s1122 = scalar_lea.vmem [#allocation5], 24
        %v1123 = vld [vmem:[%s1122] sm:$0xf]
        %v1124 = vld [vmem:[%s1122 + $0x4] sm:$0xf]
        %v1125 = vld [vmem:[%s1122 + $0x8] sm:$0xf]
        %v1158 = vunpack.c.l.b16 %v1090
        %v1159 = vunpack.c.l.b16 %v1091
        %v1160 = vunpack.c.l.b16 %v1092
        %v1161 = vunpack.c.l.b16 %v1093
        %v1162 = vunpack.c.l.b16 %v1094
        %v1163 = vunpack.c.l.b16 %v1095
        %v1164 = vunpack.c.l.b16 %v1096
        %v1165 = vunpack.c.l.b16 %v1097
        %v1166 = vunpack.c.l.b16 %v1098
        %v1167 = vunpack.c.l.b16 %v1099
        %v1168 = vunpack.c.l.b16 %v1100
        %v1169 = vunpack.c.l.b16 %v1101
        %v1170 = vunpack.c.l.b16 %v1102
        %v1171 = vunpack.c.l.b16 %v1103
        %v1172 = vunpack.c.l.b16 %v1104
        %v1173 = vunpack.c.l.b16 %v1105
        %v1174 = vunpack.c.l.b16 %v1106
        %v1175 = vunpack.c.l.b16 %v1107
        %v1176 = vunpack.c.l.b16 %v1108
        %v1177 = vunpack.c.l.b16 %v1109
        %v1178 = vunpack.c.l.b16 %v1110
        %v1179 = vunpack.c.l.b16 %v1111
        %v1180 = vunpack.c.l.b16 %v1112
        %v1181 = vunpack.c.l.b16 %v1113
        %v1182 = vunpack.c.l.b16 %v1114
        %v1183 = vunpack.c.l.b16 %v1115
        %v1184 = vunpack.c.l.b16 %v1116
        %v1185 = vunpack.c.l.b16 %v1117
        %v1186 = vunpack.c.l.b16 %v1118
        %v1187 = vunpack.c.l.b16 %v1119
        %v1188 = vunpack.c.l.b16 %v1120
        %v1189 = vunpack.c.l.b16 %v1121
        %v1190 = vpack.c.b16 %v1159, %v1158
        %v1191 = vpack.c.b16 %v1161, %v1160
        %v1192 = vpack.c.b16 %v1163, %v1162
        %v1193 = vpack.c.b16 %v1165, %v1164
        %v1194 = vpack.c.b16 %v1167, %v1166
        %v1195 = vpack.c.b16 %v1169, %v1168
        %v1196 = vpack.c.b16 %v1171, %v1170
        %v1197 = vpack.c.b16 %v1173, %v1172
        %v1198 = vpack.c.b16 %v1175, %v1174
        %v1199 = vpack.c.b16 %v1177, %v1176
        %v1200 = vpack.c.b16 %v1179, %v1178
        %v1201 = vpack.c.b16 %v1181, %v1180
        %v1202 = vpack.c.b16 %v1183, %v1182
        %v1203 = vpack.c.b16 %v1185, %v1184
        %v1204 = vpack.c.b16 %v1187, %v1186
        %v1205 = vpack.c.b16 %v1189, %v1188
        %v1209 = vunpack.c.l.b16 %v1123
        %v1210 = vunpack.c.l.b16 %v1124
        %v1211 = vunpack.c.l.b16 %v1125
        %v1212 = vpack.c.b16 %v1210, %v1209
        %v1213 = vpack.c.b16 %v1211, %v1211
        %v1216 = vsel %vm473, %v1190, 0
        %v1219 = vsel %vm473, %v1191, 0
        %v1222 = vsel %vm473, %v1192, 0
        %v1225 = vsel %vm473, %v1193, 0
        %v1228 = vsel %vm473, %v1194, 0
        %v1231 = vsel %vm473, %v1195, 0
        %v1234 = vsel %vm473, %v1196, 0
        %v1237 = vsel %vm473, %v1197, 0
        %v1240 = vsel %vm473, %v1198, 0
        %v1243 = vsel %vm473, %v1199, 0
        %v1246 = vsel %vm473, %v1200, 0
        %v1249 = vsel %vm473, %v1201, 0
        %v1252 = vsel %vm473, %v1202, 0
        %v1255 = vsel %vm473, %v1203, 0
        %v1258 = vsel %vm473, %v1204, 0
        %v1261 = vsel %vm473, %v1205, 0
        %v1264 = vsel %vm522, %v1213, 0
        %1266 = vmatprep.subr.bf16.mxu0 0
        %1267 = vmatpush1.bf16.msra.mxu0 0
        %1268 = vmatprep.subr.bf16.mxu0 0
        %1269 = vmatpush1.bf16.msra.mxu0 0
        %1270 = vmatprep.subr.bf16.mxu0 0
        %1271 = vmatpush1.bf16.msra.mxu0 0
        %1272 = vmatprep.subr.bf16.mxu0 0
        %1273 = vmatpush1.bf16.msra.mxu0 0
        %1274 = vmatprep.subr.bf16.mxu0 0
        %1275 = vmatpush1.bf16.msra.mxu0 0
        %1276 = vmatprep.subr.bf16.mxu0 0
        %1277 = vmatpush1.bf16.msra.mxu0 0
        %1278 = vmatprep.subr.bf16.mxu0 0
        %1279 = vmatpush1.bf16.msra.mxu0 %v1264
        %1280 = vmatprep.subr.bf16.mxu0 0
        %1281 = vmatpush1.bf16.msra.mxu0 %v1212
        %1282 = vmatprep.subr.bf16.mxu0 0
        %1283 = vmatpush2.bf16.msra.mxu0 0
        %1284 = vmatprep.subr.bf16.mxu0 0
        %1285 = vmatpush2.bf16.msra.mxu0 0
        %1286 = vmatprep.subr.bf16.mxu0 0
        %1287 = vmatpush2.bf16.msra.mxu0 0
        %1288 = vmatprep.subr.bf16.mxu0 0
        %1289 = vmatpush2.bf16.msra.mxu0 0
        %1290 = vmatprep.subr.bf16.mxu0 0
        %1291 = vmatpush2.bf16.msra.mxu0 0
        %1292 = vmatprep.subr.bf16.mxu0 0
        %1293 = vmatpush2.bf16.msra.mxu0 0
        %1294 = vmatprep.subr.bf16.mxu0 0
        %1295 = vmatpush2.bf16.msra.mxu0 0
        %1296 = vmatprep.subr.bf16.mxu0 0
        %1297 = vmatpush2.bf16.msra.mxu0 0
        %1298 = vmatprep.mubr.bf16.mxu0 0
        %1299 = vmatmul.mubr.bf16.gmra.mxu0 %v1216
        %v1300 = vpop.f32.mrf.mxu0
        %v1301 = vadd.f32 0.0, %v1300
        %v1302 = vpop.f32.mrf.mxu0
        %v1303 = vpop.f32.mrf.mxu0
        %v1304 = vadd.f32 0.0, %v1303
        %v1305 = vpop.f32.mrf.mxu0
        %1306 = vmatprep.mubr.bf16.mxu0 0
        %1307 = vmatmul.mubr.bf16.gmra.mxu0 %v1219
        %v1308 = vpop.f32.mrf.mxu0
        %v1309 = vadd.f32 0.0, %v1308
        %v1310 = vpop.f32.mrf.mxu0
        %v1311 = vpop.f32.mrf.mxu0
        %v1312 = vadd.f32 0.0, %v1311
        %v1313 = vpop.f32.mrf.mxu0
        %1314 = vmatprep.mubr.bf16.mxu0 0
        %1315 = vmatmul.mubr.bf16.gmra.mxu0 %v1222
        %v1316 = vpop.f32.mrf.mxu0
        %v1317 = vadd.f32 0.0, %v1316
        %v1318 = vpop.f32.mrf.mxu0
        %v1319 = vpop.f32.mrf.mxu0
        %v1320 = vadd.f32 0.0, %v1319
        %v1321 = vpop.f32.mrf.mxu0
        %1322 = vmatprep.mubr.bf16.mxu0 0
        %1323 = vmatmul.mubr.bf16.gmra.mxu0 %v1225
        %v1324 = vpop.f32.mrf.mxu0
        %v1325 = vadd.f32 0.0, %v1324
        %v1326 = vpop.f32.mrf.mxu0
        %v1327 = vpop.f32.mrf.mxu0
        %v1328 = vadd.f32 0.0, %v1327
        %v1329 = vpop.f32.mrf.mxu0
        %1330 = vmatprep.mubr.bf16.mxu0 0
        %1331 = vmatmul.mubr.bf16.gmra.mxu0 %v1228
        %v1332 = vpop.f32.mrf.mxu0
        %v1333 = vadd.f32 0.0, %v1332
        %v1334 = vpop.f32.mrf.mxu0
        %v1335 = vpop.f32.mrf.mxu0
        %v1336 = vadd.f32 0.0, %v1335
        %v1337 = vpop.f32.mrf.mxu0
        %1338 = vmatprep.mubr.bf16.mxu0 0
        %1339 = vmatmul.mubr.bf16.gmra.mxu0 %v1231
        %v1340 = vpop.f32.mrf.mxu0
        %v1341 = vadd.f32 0.0, %v1340
        %v1342 = vpop.f32.mrf.mxu0
        %v1343 = vpop.f32.mrf.mxu0
        %v1344 = vadd.f32 0.0, %v1343
        %v1345 = vpop.f32.mrf.mxu0
        %1346 = vmatprep.mubr.bf16.mxu0 0
        %1347 = vmatmul.mubr.bf16.gmra.mxu0 %v1234
        %v1348 = vpop.f32.mrf.mxu0
        %v1349 = vadd.f32 0.0, %v1348
        %v1350 = vpop.f32.mrf.mxu0
        %v1351 = vpop.f32.mrf.mxu0
        %v1352 = vadd.f32 0.0, %v1351
        %v1353 = vpop.f32.mrf.mxu0
        %1354 = vmatprep.mubr.bf16.mxu0 0
        %1355 = vmatmul.mubr.bf16.gmra.mxu0 %v1237
        %v1356 = vpop.f32.mrf.mxu0
        %v1357 = vadd.f32 0.0, %v1356
        %v1358 = vpop.f32.mrf.mxu0
        %v1359 = vpop.f32.mrf.mxu0
        %v1360 = vadd.f32 0.0, %v1359
        %v1361 = vpop.f32.mrf.mxu0
        %1362 = vmatprep.mubr.bf16.mxu0 0
        %1363 = vmatmul.mubr.bf16.gmra.mxu0 %v1240
        %v1364 = vpop.f32.mrf.mxu0
        %v1365 = vadd.f32 0.0, %v1364
        %v1366 = vpop.f32.mrf.mxu0
        %v1367 = vpop.f32.mrf.mxu0
        %v1368 = vadd.f32 0.0, %v1367
        %v1369 = vpop.f32.mrf.mxu0
        %1370 = vmatprep.mubr.bf16.mxu0 0
        %1371 = vmatmul.mubr.bf16.gmra.mxu0 %v1243
        %v1372 = vpop.f32.mrf.mxu0
        %v1373 = vadd.f32 0.0, %v1372
        %v1374 = vpop.f32.mrf.mxu0
        %v1375 = vpop.f32.mrf.mxu0
        %v1376 = vadd.f32 0.0, %v1375
        %v1377 = vpop.f32.mrf.mxu0
        %1378 = vmatprep.mubr.bf16.mxu0 0
        %1379 = vmatmul.mubr.bf16.gmra.mxu0 %v1246
        %v1380 = vpop.f32.mrf.mxu0
        %v1381 = vadd.f32 0.0, %v1380
        %v1382 = vpop.f32.mrf.mxu0
        %v1383 = vpop.f32.mrf.mxu0
        %v1384 = vadd.f32 0.0, %v1383
        %v1385 = vpop.f32.mrf.mxu0
        %1386 = vmatprep.mubr.bf16.mxu0 0
        %1387 = vmatmul.mubr.bf16.gmra.mxu0 %v1249
        %v1388 = vpop.f32.mrf.mxu0
        %v1389 = vadd.f32 0.0, %v1388
        %v1390 = vpop.f32.mrf.mxu0
        %v1391 = vpop.f32.mrf.mxu0
        %v1392 = vadd.f32 0.0, %v1391
        %v1393 = vpop.f32.mrf.mxu0
        %1394 = vmatprep.mubr.bf16.mxu0 0
        %1395 = vmatmul.mubr.bf16.gmra.mxu0 %v1252
        %v1396 = vpop.f32.mrf.mxu0
        %v1397 = vadd.f32 0.0, %v1396
        %v1398 = vpop.f32.mrf.mxu0
        %v1399 = vpop.f32.mrf.mxu0
        %v1400 = vadd.f32 0.0, %v1399
        %v1401 = vpop.f32.mrf.mxu0
        %1402 = vmatprep.mubr.bf16.mxu0 0
        %1403 = vmatmul.mubr.bf16.gmra.mxu0 %v1255
        %v1404 = vpop.f32.mrf.mxu0
        %v1405 = vadd.f32 0.0, %v1404
        %v1406 = vpop.f32.mrf.mxu0
        %v1407 = vpop.f32.mrf.mxu0
        %v1408 = vadd.f32 0.0, %v1407
        %v1409 = vpop.f32.mrf.mxu0
        %1410 = vmatprep.mubr.bf16.mxu0 0
        %1411 = vmatmul.mubr.bf16.gmra.mxu0 %v1258
        %v1412 = vpop.f32.mrf.mxu0
        %v1413 = vadd.f32 0.0, %v1412
        %v1414 = vpop.f32.mrf.mxu0
        %v1415 = vpop.f32.mrf.mxu0
        %v1416 = vadd.f32 0.0, %v1415
        %v1417 = vpop.f32.mrf.mxu0
        %1418 = vmatprep.mubr.bf16.mxu0 0
        %1419 = vmatmul.mubr.bf16.gmra.mxu0 %v1261
        %v1420 = vpop.f32.mrf.mxu0
        %v1421 = vadd.f32 0.0, %v1420
        %v1422 = vpop.f32.mrf.mxu0
        %v1423 = vpop.f32.mrf.mxu0
        %v1424 = vadd.f32 0.0, %v1423
        %v1425 = vpop.f32.mrf.mxu0
        %1426 = vdwg.mxu0
        %v1427 = vadd.f32 %v1057, %v1301
        %v1428 = vadd.f32 %v1058, %v1304
        %v1429 = vadd.f32 %v1059, %v1309
        %v1430 = vadd.f32 %v1060, %v1312
        %v1431 = vadd.f32 %v1061, %v1317
        %v1432 = vadd.f32 %v1062, %v1320
        %v1433 = vadd.f32 %v1063, %v1325
        %v1434 = vadd.f32 %v1064, %v1328
        %v1435 = vadd.f32 %v1065, %v1333
        %v1436 = vadd.f32 %v1066, %v1336
        %v1437 = vadd.f32 %v1067, %v1341
        %v1438 = vadd.f32 %v1068, %v1344
        %v1439 = vadd.f32 %v1069, %v1349
        %v1440 = vadd.f32 %v1070, %v1352
        %v1441 = vadd.f32 %v1071, %v1357
        %v1442 = vadd.f32 %v1072, %v1360
        %v1443 = vadd.f32 %v1073, %v1365
        %v1444 = vadd.f32 %v1074, %v1368
        %v1445 = vadd.f32 %v1075, %v1373
        %v1446 = vadd.f32 %v1076, %v1376
        %v1447 = vadd.f32 %v1077, %v1381
        %v1448 = vadd.f32 %v1078, %v1384
        %v1449 = vadd.f32 %v1079, %v1389
        %v1450 = vadd.f32 %v1080, %v1392
        %v1451 = vadd.f32 %v1081, %v1397
        %v1452 = vadd.f32 %v1082, %v1400
        %v1453 = vadd.f32 %v1083, %v1405
        %v1454 = vadd.f32 %v1084, %v1408
        %v1455 = vadd.f32 %v1085, %v1413
        %v1456 = vadd.f32 %v1086, %v1416
        %v1457 = vadd.f32 %v1087, %v1421
        %v1458 = vadd.f32 %v1088, %v1424
        %v1459 = vmax.f32 %v1427, 0.0
        %v1460 = vmax.f32 %v1428, 0.0
        %v1461 = vmax.f32 %v1429, 0.0
        %v1462 = vmax.f32 %v1430, 0.0
        %v1463 = vmax.f32 %v1431, 0.0
        %v1464 = vmax.f32 %v1432, 0.0
        %v1465 = vmax.f32 %v1433, 0.0
        %v1466 = vmax.f32 %v1434, 0.0
        %v1467 = vmax.f32 %v1435, 0.0
        %v1468 = vmax.f32 %v1436, 0.0
        %v1469 = vmax.f32 %v1437, 0.0
        %v1470 = vmax.f32 %v1438, 0.0
        %v1471 = vmax.f32 %v1439, 0.0
        %v1472 = vmax.f32 %v1440, 0.0
        %v1473 = vmax.f32 %v1441, 0.0
        %v1474 = vmax.f32 %v1442, 0.0
        %v1475 = vmax.f32 %v1443, 0.0
        %v1476 = vmax.f32 %v1444, 0.0
        %v1477 = vmax.f32 %v1445, 0.0
        %v1478 = vmax.f32 %v1446, 0.0
        %v1479 = vmax.f32 %v1447, 0.0
        %v1480 = vmax.f32 %v1448, 0.0
        %v1481 = vmax.f32 %v1449, 0.0
        %v1482 = vmax.f32 %v1450, 0.0
        %v1483 = vmax.f32 %v1451, 0.0
        %v1484 = vmax.f32 %v1452, 0.0
        %v1485 = vmax.f32 %v1453, 0.0
        %v1486 = vmax.f32 %v1454, 0.0
        %v1487 = vmax.f32 %v1455, 0.0
        %v1488 = vmax.f32 %v1456, 0.0
        %v1489 = vmax.f32 %v1457, 0.0
        %v1490 = vmax.f32 %v1458, 0.0
        %v1491 = vpack.c.bf16 %v1460, %v1459
        %v1492 = vpack.c.bf16 %v1462, %v1461
        %v1493 = vpack.c.bf16 %v1464, %v1463
        %v1494 = vpack.c.bf16 %v1466, %v1465
        %v1495 = vpack.c.bf16 %v1468, %v1467
        %v1496 = vpack.c.bf16 %v1470, %v1469
        %v1497 = vpack.c.bf16 %v1472, %v1471
        %v1498 = vpack.c.bf16 %v1474, %v1473
        %v1499 = vpack.c.bf16 %v1476, %v1475
        %v1500 = vpack.c.bf16 %v1478, %v1477
        %v1501 = vpack.c.bf16 %v1480, %v1479
        %v1502 = vpack.c.bf16 %v1482, %v1481
        %v1503 = vpack.c.bf16 %v1484, %v1483
        %v1504 = vpack.c.bf16 %v1486, %v1485
        %v1505 = vpack.c.bf16 %v1488, %v1487
        %v1506 = vpack.c.bf16 %v1490, %v1489
        %v1507 = vld [vmem:[#allocation7] sm:$0xf]
        %v1508 = vld [vmem:[#allocation7 + $0x4] sm:$0xf]
        %v1509 = vld [vmem:[#allocation7 + $0x8] sm:$0xf]
        %v1510 = vld [vmem:[#allocation7 + $0xc] sm:$0xf]
        %v1511 = vld [vmem:[#allocation7 + $0x10] sm:$0xf]
        %v1512 = vld [vmem:[#allocation7 + $0x14] sm:$0xf]
        %v1513 = vld [vmem:[#allocation7 + $0x18] sm:$0xf]
        %v1514 = vld [vmem:[#allocation7 + $0x1c] sm:$0xf]
        %v1515 = vld [vmem:[#allocation7 + $0x20] sm:$0xf]
        %v1516 = vld [vmem:[#allocation7 + $0x24] sm:$0xf]
        %v1517 = vld [vmem:[#allocation7 + $0x28] sm:$0xf]
        %v1518 = vld [vmem:[#allocation7 + $0x2c] sm:$0xf]
        %v1519 = vld [vmem:[#allocation7 + $0x30] sm:$0xf]
        %v1520 = vld [vmem:[#allocation7 + $0x34] sm:$0xf]
        %v1521 = vld [vmem:[#allocation7 + $0x38] sm:$0xf]
        %v1522 = vld [vmem:[#allocation7 + $0x3c] sm:$0xf]
        %v1523 = vld [vmem:[%s4] sm:$0x1]
        %v1525 = vlaneseq
        %v1526 = vshrl.u32 %v1525, 7
        %v1527 = vsub.s32 0, %v1526
        %v1528 = vrot.slane %v1523, %v1527
        %v1546 = vunpack.c.l.b16 %v1507
        %v1547 = vunpack.c.l.b16 %v1508
        %v1548 = vunpack.c.l.b16 %v1509
        %v1549 = vunpack.c.l.b16 %v1510
        %v1550 = vunpack.c.l.b16 %v1511
        %v1551 = vunpack.c.l.b16 %v1512
        %v1552 = vunpack.c.l.b16 %v1513
        %v1553 = vunpack.c.l.b16 %v1514
        %v1554 = vunpack.c.l.b16 %v1515
        %v1555 = vunpack.c.l.b16 %v1516
        %v1556 = vunpack.c.l.b16 %v1517
        %v1557 = vunpack.c.l.b16 %v1518
        %v1558 = vunpack.c.l.b16 %v1519
        %v1559 = vunpack.c.l.b16 %v1520
        %v1560 = vunpack.c.l.b16 %v1521
        %v1561 = vunpack.c.l.b16 %v1522
        %v1562 = vpack.c.b16 %v1547, %v1546
        %v1563 = vpack.c.b16 %v1549, %v1548
        %v1564 = vpack.c.b16 %v1551, %v1550
        %v1565 = vpack.c.b16 %v1553, %v1552
        %v1566 = vpack.c.b16 %v1555, %v1554
        %v1567 = vpack.c.b16 %v1557, %v1556
        %v1568 = vpack.c.b16 %v1559, %v1558
        %v1569 = vpack.c.b16 %v1561, %v1560
        %1578 = vmatprep.subr.bf16.mxu0 0
        %1579 = vmatpush1.bf16.msra.mxu0 %v1569
        %1580 = vmatprep.subr.bf16.mxu0 0
        %1581 = vmatpush1.bf16.msra.mxu0 %v1568
        %1582 = vmatprep.subr.bf16.mxu0 0
        %1583 = vmatpush1.bf16.msra.mxu0 %v1567
        %1584 = vmatprep.subr.bf16.mxu0 0
        %1585 = vmatpush1.bf16.msra.mxu0 %v1566
        %1586 = vmatprep.subr.bf16.mxu0 0
        %1587 = vmatpush1.bf16.msra.mxu0 %v1565
        %1588 = vmatprep.subr.bf16.mxu0 0
        %1589 = vmatpush1.bf16.msra.mxu0 %v1564
        %1590 = vmatprep.subr.bf16.mxu0 0
        %1591 = vmatpush1.bf16.msra.mxu0 %v1563
        %1592 = vmatprep.subr.bf16.mxu0 0
        %1593 = vmatpush1.bf16.msra.mxu0 %v1562
        %1594 = vmatprep.subr.bf16.mxu0 0
        %1595 = vmatpush2.bf16.msra.mxu0 0
        %1596 = vmatprep.subr.bf16.mxu0 0
        %1597 = vmatpush2.bf16.msra.mxu0 0
        %1598 = vmatprep.subr.bf16.mxu0 0
        %1599 = vmatpush2.bf16.msra.mxu0 0
        %1600 = vmatprep.subr.bf16.mxu0 0
        %1601 = vmatpush2.bf16.msra.mxu0 0
        %1602 = vmatprep.subr.bf16.mxu0 0
        %1603 = vmatpush2.bf16.msra.mxu0 0
        %1604 = vmatprep.subr.bf16.mxu0 0
        %1605 = vmatpush2.bf16.msra.mxu0 0
        %1606 = vmatprep.subr.bf16.mxu0 0
        %1607 = vmatpush2.bf16.msra.mxu0 0
        %1608 = vmatprep.subr.bf16.mxu0 0
        %1609 = vmatpush2.bf16.msra.mxu0 0
        %1610 = vmatprep.mubr.bf16.mxu0 0
        %1611 = vmatmul.mubr.bf16.gmra.mxu0 %v1491
        %v1612 = vpop.f32.mrf.mxu0
        %v1613 = vadd.f32 %v1528, %v1612
        %v1614 = vpop.f32.mrf.mxu0
        %v1615 = vpop.f32.mrf.mxu0
        %v1616 = vadd.f32 %v1528, %v1615
        %v1617 = vpop.f32.mrf.mxu0
        %1618 = vmatprep.mubr.bf16.mxu0 0
        %1619 = vmatmul.mubr.bf16.gmra.mxu0 %v1492
        %v1620 = vpop.f32.mrf.mxu0
        %v1621 = vadd.f32 %v1528, %v1620
        %v1622 = vpop.f32.mrf.mxu0
        %v1623 = vpop.f32.mrf.mxu0
        %v1624 = vadd.f32 %v1528, %v1623
        %v1625 = vpop.f32.mrf.mxu0
        %1626 = vmatprep.mubr.bf16.mxu0 0
        %1627 = vmatmul.mubr.bf16.gmra.mxu0 %v1493
        %v1628 = vpop.f32.mrf.mxu0
        %v1629 = vadd.f32 %v1528, %v1628
        %v1630 = vpop.f32.mrf.mxu0
        %v1631 = vpop.f32.mrf.mxu0
        %v1632 = vadd.f32 %v1528, %v1631
        %v1633 = vpop.f32.mrf.mxu0
        %1634 = vmatprep.mubr.bf16.mxu0 0
        %1635 = vmatmul.mubr.bf16.gmra.mxu0 %v1494
        %v1636 = vpop.f32.mrf.mxu0
        %v1637 = vadd.f32 %v1528, %v1636
        %v1638 = vpop.f32.mrf.mxu0
        %v1639 = vpop.f32.mrf.mxu0
        %v1640 = vadd.f32 %v1528, %v1639
        %v1641 = vpop.f32.mrf.mxu0
        %1642 = vmatprep.mubr.bf16.mxu0 0
        %1643 = vmatmul.mubr.bf16.gmra.mxu0 %v1495
        %v1644 = vpop.f32.mrf.mxu0
        %v1645 = vadd.f32 %v1528, %v1644
        %v1646 = vpop.f32.mrf.mxu0
        %v1647 = vpop.f32.mrf.mxu0
        %v1648 = vadd.f32 %v1528, %v1647
        %v1649 = vpop.f32.mrf.mxu0
        %1650 = vmatprep.mubr.bf16.mxu0 0
        %1651 = vmatmul.mubr.bf16.gmra.mxu0 %v1496
        %v1652 = vpop.f32.mrf.mxu0
        %v1653 = vadd.f32 %v1528, %v1652
        %v1654 = vpop.f32.mrf.mxu0
        %v1655 = vpop.f32.mrf.mxu0
        %v1656 = vadd.f32 %v1528, %v1655
        %v1657 = vpop.f32.mrf.mxu0
        %1658 = vmatprep.mubr.bf16.mxu0 0
        %1659 = vmatmul.mubr.bf16.gmra.mxu0 %v1497
        %v1660 = vpop.f32.mrf.mxu0
        %v1661 = vadd.f32 %v1528, %v1660
        %v1662 = vpop.f32.mrf.mxu0
        %v1663 = vpop.f32.mrf.mxu0
        %v1664 = vadd.f32 %v1528, %v1663
        %v1665 = vpop.f32.mrf.mxu0
        %1666 = vmatprep.mubr.bf16.mxu0 0
        %1667 = vmatmul.mubr.bf16.gmra.mxu0 %v1498
        %v1668 = vpop.f32.mrf.mxu0
        %v1669 = vadd.f32 %v1528, %v1668
        %v1670 = vpop.f32.mrf.mxu0
        %v1671 = vpop.f32.mrf.mxu0
        %v1672 = vadd.f32 %v1528, %v1671
        %v1673 = vpop.f32.mrf.mxu0
        %1674 = vmatprep.mubr.bf16.mxu0 0
        %1675 = vmatmul.mubr.bf16.gmra.mxu0 %v1499
        %v1676 = vpop.f32.mrf.mxu0
        %v1677 = vadd.f32 %v1528, %v1676
        %v1678 = vpop.f32.mrf.mxu0
        %v1679 = vpop.f32.mrf.mxu0
        %v1680 = vadd.f32 %v1528, %v1679
        %v1681 = vpop.f32.mrf.mxu0
        %1682 = vmatprep.mubr.bf16.mxu0 0
        %1683 = vmatmul.mubr.bf16.gmra.mxu0 %v1500
        %v1684 = vpop.f32.mrf.mxu0
        %v1685 = vadd.f32 %v1528, %v1684
        %v1686 = vpop.f32.mrf.mxu0
        %v1687 = vpop.f32.mrf.mxu0
        %v1688 = vadd.f32 %v1528, %v1687
        %v1689 = vpop.f32.mrf.mxu0
        %1690 = vmatprep.mubr.bf16.mxu0 0
        %1691 = vmatmul.mubr.bf16.gmra.mxu0 %v1501
        %v1692 = vpop.f32.mrf.mxu0
        %v1693 = vadd.f32 %v1528, %v1692
        %v1694 = vpop.f32.mrf.mxu0
        %v1695 = vpop.f32.mrf.mxu0
        %v1696 = vadd.f32 %v1528, %v1695
        %v1697 = vpop.f32.mrf.mxu0
        %1698 = vmatprep.mubr.bf16.mxu0 0
        %1699 = vmatmul.mubr.bf16.gmra.mxu0 %v1502
        %v1700 = vpop.f32.mrf.mxu0
        %v1701 = vadd.f32 %v1528, %v1700
        %v1702 = vpop.f32.mrf.mxu0
        %v1703 = vpop.f32.mrf.mxu0
        %v1704 = vadd.f32 %v1528, %v1703
        %v1705 = vpop.f32.mrf.mxu0
        %1706 = vmatprep.mubr.bf16.mxu0 0
        %1707 = vmatmul.mubr.bf16.gmra.mxu0 %v1503
        %v1708 = vpop.f32.mrf.mxu0
        %v1709 = vadd.f32 %v1528, %v1708
        %v1710 = vpop.f32.mrf.mxu0
        %v1711 = vpop.f32.mrf.mxu0
        %v1712 = vadd.f32 %v1528, %v1711
        %v1713 = vpop.f32.mrf.mxu0
        %1714 = vmatprep.mubr.bf16.mxu0 0
        %1715 = vmatmul.mubr.bf16.gmra.mxu0 %v1504
        %v1716 = vpop.f32.mrf.mxu0
        %v1717 = vadd.f32 %v1528, %v1716
        %v1718 = vpop.f32.mrf.mxu0
        %v1719 = vpop.f32.mrf.mxu0
        %v1720 = vadd.f32 %v1528, %v1719
        %v1721 = vpop.f32.mrf.mxu0
        %1722 = vmatprep.mubr.bf16.mxu0 0
        %1723 = vmatmul.mubr.bf16.gmra.mxu0 %v1505
        %v1724 = vpop.f32.mrf.mxu0
        %v1725 = vadd.f32 %v1528, %v1724
        %v1726 = vpop.f32.mrf.mxu0
        %v1727 = vpop.f32.mrf.mxu0
        %v1728 = vadd.f32 %v1528, %v1727
        %v1729 = vpop.f32.mrf.mxu0
        %1730 = vmatprep.mubr.bf16.mxu0 0
        %1731 = vmatmul.mubr.bf16.gmra.mxu0 %v1506
        %v1732 = vpop.f32.mrf.mxu0
        %v1733 = vadd.f32 %v1528, %v1732
        %v1734 = vpop.f32.mrf.mxu0
        %v1735 = vpop.f32.mrf.mxu0
        %v1736 = vadd.f32 %v1528, %v1735
        %v1737 = vpop.f32.mrf.mxu0
        %1738 = vdwg.mxu0
        %v1739 = vmax.f32 %v1613, 0.0
        %v1740 = vmax.f32 %v1616, 0.0
        %v1741 = vmax.f32 %v1621, 0.0
        %v1742 = vmax.f32 %v1624, 0.0
        %v1743 = vmax.f32 %v1629, 0.0
        %v1744 = vmax.f32 %v1632, 0.0
        %v1745 = vmax.f32 %v1637, 0.0
        %v1746 = vmax.f32 %v1640, 0.0
        %v1747 = vmax.f32 %v1645, 0.0
        %v1748 = vmax.f32 %v1648, 0.0
        %v1749 = vmax.f32 %v1653, 0.0
        %v1750 = vmax.f32 %v1656, 0.0
        %v1751 = vmax.f32 %v1661, 0.0
        %v1752 = vmax.f32 %v1664, 0.0
        %v1753 = vmax.f32 %v1669, 0.0
        %v1754 = vmax.f32 %v1672, 0.0
        %v1755 = vmax.f32 %v1677, 0.0
        %v1756 = vmax.f32 %v1680, 0.0
        %v1757 = vmax.f32 %v1685, 0.0
        %v1758 = vmax.f32 %v1688, 0.0
        %v1759 = vmax.f32 %v1693, 0.0
        %v1760 = vmax.f32 %v1696, 0.0
        %v1761 = vmax.f32 %v1701, 0.0
        %v1762 = vmax.f32 %v1704, 0.0
        %v1763 = vmax.f32 %v1709, 0.0
        %v1764 = vmax.f32 %v1712, 0.0
        %v1765 = vmax.f32 %v1717, 0.0
        %v1766 = vmax.f32 %v1720, 0.0
        %v1767 = vmax.f32 %v1725, 0.0
        %v1768 = vmax.f32 %v1728, 0.0
        %v1769 = vmax.f32 %v1733, 0.0
        %v1770 = vmax.f32 %v1736, 0.0
        %v1771 = vpack.c.bf16 %v1740, %v1739
        %v1772 = vpack.c.bf16 %v1742, %v1741
        %v1773 = vpack.c.bf16 %v1744, %v1743
        %v1774 = vpack.c.bf16 %v1746, %v1745
        %v1775 = vpack.c.bf16 %v1748, %v1747
        %v1776 = vpack.c.bf16 %v1750, %v1749
        %v1777 = vpack.c.bf16 %v1752, %v1751
        %v1778 = vpack.c.bf16 %v1754, %v1753
        %v1779 = vpack.c.bf16 %v1756, %v1755
        %v1780 = vpack.c.bf16 %v1758, %v1757
        %v1781 = vpack.c.bf16 %v1760, %v1759
        %v1782 = vpack.c.bf16 %v1762, %v1761
        %v1783 = vpack.c.bf16 %v1764, %v1763
        %v1784 = vpack.c.bf16 %v1766, %v1765
        %v1785 = vpack.c.bf16 %v1768, %v1767
        %v1786 = vpack.c.bf16 %v1770, %v1769
        %v1787 = vld [vmem:[#allocation8] sm:$0xf]
        %v1788 = vld [vmem:[#allocation8 + $0x4] sm:$0xf]
        %v1789 = vld [vmem:[#allocation8 + $0x8] sm:$0xf]
        %v1790 = vld [vmem:[#allocation8 + $0xc] sm:$0xf]
        %v1791 = vld [vmem:[#allocation8 + $0x10] sm:$0xf]
        %v1792 = vld [vmem:[#allocation8 + $0x14] sm:$0xf]
        %v1793 = vld [vmem:[#allocation8 + $0x18] sm:$0xf]
        %v1794 = vld [vmem:[#allocation8 + $0x1c] sm:$0xf]
        %v1795 = vld [vmem:[#allocation8 + $0x20] sm:$0xf]
        %v1796 = vld [vmem:[#allocation8 + $0x24] sm:$0xf]
        %v1797 = vld [vmem:[#allocation8 + $0x28] sm:$0xf]
        %v1798 = vld [vmem:[#allocation8 + $0x2c] sm:$0xf]
        %v1799 = vld [vmem:[#allocation8 + $0x30] sm:$0xf]
        %v1800 = vld [vmem:[#allocation8 + $0x34] sm:$0xf]
        %v1801 = vld [vmem:[#allocation8 + $0x38] sm:$0xf]
        %v1802 = vld [vmem:[#allocation8 + $0x3c] sm:$0xf]
        %v1803 = vld [vmem:[%s6] sm:$0x1]
        %v1805 = vlaneseq
        %v1806 = vshrl.u32 %v1805, 7
        %v1807 = vsub.s32 0, %v1806
        %v1808 = vrot.slane %v1803, %v1807
        %v1826 = vunpack.c.l.b16 %v1787
        %v1827 = vunpack.c.l.b16 %v1788
        %v1828 = vunpack.c.l.b16 %v1789
        %v1829 = vunpack.c.l.b16 %v1790
        %v1830 = vunpack.c.l.b16 %v1791
        %v1831 = vunpack.c.l.b16 %v1792
        %v1832 = vunpack.c.l.b16 %v1793
        %v1833 = vunpack.c.l.b16 %v1794
        %v1834 = vunpack.c.l.b16 %v1795
        %v1835 = vunpack.c.l.b16 %v1796
        %v1836 = vunpack.c.l.b16 %v1797
        %v1837 = vunpack.c.l.b16 %v1798
        %v1838 = vunpack.c.l.b16 %v1799
        %v1839 = vunpack.c.l.b16 %v1800
        %v1840 = vunpack.c.l.b16 %v1801
        %v1841 = vunpack.c.l.b16 %v1802
        %v1842 = vpack.c.b16 %v1827, %v1826
        %v1843 = vpack.c.b16 %v1829, %v1828
        %v1844 = vpack.c.b16 %v1831, %v1830
        %v1845 = vpack.c.b16 %v1833, %v1832
        %v1846 = vpack.c.b16 %v1835, %v1834
        %v1847 = vpack.c.b16 %v1837, %v1836
        %v1848 = vpack.c.b16 %v1839, %v1838
        %v1849 = vpack.c.b16 %v1841, %v1840
        %1858 = vmatprep.subr.bf16.mxu0 0
        %1859 = vmatpush1.bf16.msra.mxu0 %v1849
        %1860 = vmatprep.subr.bf16.mxu0 0
        %1861 = vmatpush1.bf16.msra.mxu0 %v1848
        %1862 = vmatprep.subr.bf16.mxu0 0
        %1863 = vmatpush1.bf16.msra.mxu0 %v1847
        %1864 = vmatprep.subr.bf16.mxu0 0
        %1865 = vmatpush1.bf16.msra.mxu0 %v1846
        %1866 = vmatprep.subr.bf16.mxu0 0
        %1867 = vmatpush1.bf16.msra.mxu0 %v1845
        %1868 = vmatprep.subr.bf16.mxu0 0
        %1869 = vmatpush1.bf16.msra.mxu0 %v1844
        %1870 = vmatprep.subr.bf16.mxu0 0
        %1871 = vmatpush1.bf16.msra.mxu0 %v1843
        %1872 = vmatprep.subr.bf16.mxu0 0
        %1873 = vmatpush1.bf16.msra.mxu0 %v1842
        %1874 = vmatprep.subr.bf16.mxu0 0
        %1875 = vmatpush2.bf16.msra.mxu0 0
        %1876 = vmatprep.subr.bf16.mxu0 0
        %1877 = vmatpush2.bf16.msra.mxu0 0
        %1878 = vmatprep.subr.bf16.mxu0 0
        %1879 = vmatpush2.bf16.msra.mxu0 0
        %1880 = vmatprep.subr.bf16.mxu0 0
        %1881 = vmatpush2.bf16.msra.mxu0 0
        %1882 = vmatprep.subr.bf16.mxu0 0
        %1883 = vmatpush2.bf16.msra.mxu0 0
        %1884 = vmatprep.subr.bf16.mxu0 0
        %1885 = vmatpush2.bf16.msra.mxu0 0
        %1886 = vmatprep.subr.bf16.mxu0 0
        %1887 = vmatpush2.bf16.msra.mxu0 0
        %1888 = vmatprep.subr.bf16.mxu0 0
        %1889 = vmatpush2.bf16.msra.mxu0 0
        %1890 = vmatprep.mubr.bf16.mxu0 0
        %1891 = vmatmul.mubr.bf16.gmra.mxu0 %v1771
        %v1892 = vpop.f32.mrf.mxu0
        %v1893 = vadd.f32 %v1808, %v1892
        %v1894 = vpop.f32.mrf.mxu0
        %v1895 = vpop.f32.mrf.mxu0
        %v1896 = vadd.f32 %v1808, %v1895
        %v1897 = vpop.f32.mrf.mxu0
        %1898 = vmatprep.mubr.bf16.mxu0 0
        %1899 = vmatmul.mubr.bf16.gmra.mxu0 %v1772
        %v1900 = vpop.f32.mrf.mxu0
        %v1901 = vadd.f32 %v1808, %v1900
        %v1902 = vpop.f32.mrf.mxu0
        %v1903 = vpop.f32.mrf.mxu0
        %v1904 = vadd.f32 %v1808, %v1903
        %v1905 = vpop.f32.mrf.mxu0
        %1906 = vmatprep.mubr.bf16.mxu0 0
        %1907 = vmatmul.mubr.bf16.gmra.mxu0 %v1773
        %v1908 = vpop.f32.mrf.mxu0
        %v1909 = vadd.f32 %v1808, %v1908
        %v1910 = vpop.f32.mrf.mxu0
        %v1911 = vpop.f32.mrf.mxu0
        %v1912 = vadd.f32 %v1808, %v1911
        %v1913 = vpop.f32.mrf.mxu0
        %1914 = vmatprep.mubr.bf16.mxu0 0
        %1915 = vmatmul.mubr.bf16.gmra.mxu0 %v1774
        %v1916 = vpop.f32.mrf.mxu0
        %v1917 = vadd.f32 %v1808, %v1916
        %v1918 = vpop.f32.mrf.mxu0
        %v1919 = vpop.f32.mrf.mxu0
        %v1920 = vadd.f32 %v1808, %v1919
        %v1921 = vpop.f32.mrf.mxu0
        %1922 = vmatprep.mubr.bf16.mxu0 0
        %1923 = vmatmul.mubr.bf16.gmra.mxu0 %v1775
        %v1924 = vpop.f32.mrf.mxu0
        %v1925 = vadd.f32 %v1808, %v1924
        %v1926 = vpop.f32.mrf.mxu0
        %v1927 = vpop.f32.mrf.mxu0
        %v1928 = vadd.f32 %v1808, %v1927
        %v1929 = vpop.f32.mrf.mxu0
        %1930 = vmatprep.mubr.bf16.mxu0 0
        %1931 = vmatmul.mubr.bf16.gmra.mxu0 %v1776
        %v1932 = vpop.f32.mrf.mxu0
        %v1933 = vadd.f32 %v1808, %v1932
        %v1934 = vpop.f32.mrf.mxu0
        %v1935 = vpop.f32.mrf.mxu0
        %v1936 = vadd.f32 %v1808, %v1935
        %v1937 = vpop.f32.mrf.mxu0
        %1938 = vmatprep.mubr.bf16.mxu0 0
        %1939 = vmatmul.mubr.bf16.gmra.mxu0 %v1777
        %v1940 = vpop.f32.mrf.mxu0
        %v1941 = vadd.f32 %v1808, %v1940
        %v1942 = vpop.f32.mrf.mxu0
        %v1943 = vpop.f32.mrf.mxu0
        %v1944 = vadd.f32 %v1808, %v1943
        %v1945 = vpop.f32.mrf.mxu0
        %1946 = vmatprep.mubr.bf16.mxu0 0
        %1947 = vmatmul.mubr.bf16.gmra.mxu0 %v1778
        %v1948 = vpop.f32.mrf.mxu0
        %v1949 = vadd.f32 %v1808, %v1948
        %v1950 = vpop.f32.mrf.mxu0
        %v1951 = vpop.f32.mrf.mxu0
        %v1952 = vadd.f32 %v1808, %v1951
        %v1953 = vpop.f32.mrf.mxu0
        %1954 = vmatprep.mubr.bf16.mxu0 0
        %1955 = vmatmul.mubr.bf16.gmra.mxu0 %v1779
        %v1956 = vpop.f32.mrf.mxu0
        %v1957 = vadd.f32 %v1808, %v1956
        %v1958 = vpop.f32.mrf.mxu0
        %v1959 = vpop.f32.mrf.mxu0
        %v1960 = vadd.f32 %v1808, %v1959
        %v1961 = vpop.f32.mrf.mxu0
        %1962 = vmatprep.mubr.bf16.mxu0 0
        %1963 = vmatmul.mubr.bf16.gmra.mxu0 %v1780
        %v1964 = vpop.f32.mrf.mxu0
        %v1965 = vadd.f32 %v1808, %v1964
        %v1966 = vpop.f32.mrf.mxu0
        %v1967 = vpop.f32.mrf.mxu0
        %v1968 = vadd.f32 %v1808, %v1967
        %v1969 = vpop.f32.mrf.mxu0
        %1970 = vmatprep.mubr.bf16.mxu0 0
        %1971 = vmatmul.mubr.bf16.gmra.mxu0 %v1781
        %v1972 = vpop.f32.mrf.mxu0
        %v1973 = vadd.f32 %v1808, %v1972
        %v1974 = vpop.f32.mrf.mxu0
        %v1975 = vpop.f32.mrf.mxu0
        %v1976 = vadd.f32 %v1808, %v1975
        %v1977 = vpop.f32.mrf.mxu0
        %1978 = vmatprep.mubr.bf16.mxu0 0
        %1979 = vmatmul.mubr.bf16.gmra.mxu0 %v1782
        %v1980 = vpop.f32.mrf.mxu0
        %v1981 = vadd.f32 %v1808, %v1980
        %v1982 = vpop.f32.mrf.mxu0
        %v1983 = vpop.f32.mrf.mxu0
        %v1984 = vadd.f32 %v1808, %v1983
        %v1985 = vpop.f32.mrf.mxu0
        %1986 = vmatprep.mubr.bf16.mxu0 0
        %1987 = vmatmul.mubr.bf16.gmra.mxu0 %v1783
        %v1988 = vpop.f32.mrf.mxu0
        %v1989 = vadd.f32 %v1808, %v1988
        %v1990 = vpop.f32.mrf.mxu0
        %v1991 = vpop.f32.mrf.mxu0
        %v1992 = vadd.f32 %v1808, %v1991
        %v1993 = vpop.f32.mrf.mxu0
        %1994 = vmatprep.mubr.bf16.mxu0 0
        %1995 = vmatmul.mubr.bf16.gmra.mxu0 %v1784
        %v1996 = vpop.f32.mrf.mxu0
        %v1997 = vadd.f32 %v1808, %v1996
        %v1998 = vpop.f32.mrf.mxu0
        %v1999 = vpop.f32.mrf.mxu0
        %v2000 = vadd.f32 %v1808, %v1999
        %v2001 = vpop.f32.mrf.mxu0
        %2002 = vmatprep.mubr.bf16.mxu0 0
        %2003 = vmatmul.mubr.bf16.gmra.mxu0 %v1785
        %v2004 = vpop.f32.mrf.mxu0
        %v2005 = vadd.f32 %v1808, %v2004
        %v2006 = vpop.f32.mrf.mxu0
        %v2007 = vpop.f32.mrf.mxu0
        %v2008 = vadd.f32 %v1808, %v2007
        %v2009 = vpop.f32.mrf.mxu0
        %2010 = vmatprep.mubr.bf16.mxu0 0
        %2011 = vmatmul.mubr.bf16.gmra.mxu0 %v1786
        %v2012 = vpop.f32.mrf.mxu0
        %v2013 = vadd.f32 %v1808, %v2012
        %v2014 = vpop.f32.mrf.mxu0
        %v2015 = vpop.f32.mrf.mxu0
        %v2016 = vadd.f32 %v1808, %v2015
        %v2017 = vpop.f32.mrf.mxu0
        %2018 = vdwg.mxu0
        %2019 = vxpose.xlu0.b32.start [1/16] %v1893, 128
        %2020 = vxpose.xlu0.b32.cont [2/16] %v1896, 128
        %2021 = vxpose.xlu0.b32.cont [3/16] %v1901, 128
        %2022 = vxpose.xlu0.b32.cont [4/16] %v1904, 128
        %2023 = vxpose.xlu0.b32.cont [5/16] %v1909, 128
        %2024 = vxpose.xlu0.b32.cont [6/16] %v1912, 128
        %2025 = vxpose.xlu0.b32.cont [7/16] %v1917, 128
        %2026 = vxpose.xlu0.b32.cont [8/16] %v1920, 128
        %2027 = vxpose.xlu0.b32.cont [9/16] %v1925, 128
        %2028 = vxpose.xlu0.b32.cont [10/16] %v1928, 128
        %2029 = vxpose.xlu0.b32.cont [11/16] %v1933, 128
        %2030 = vxpose.xlu0.b32.cont [12/16] %v1936, 128
        %2031 = vxpose.xlu0.b32.cont [13/16] %v1941, 128
        %2032 = vxpose.xlu0.b32.cont [14/16] %v1944, 128
        %2033 = vxpose.xlu0.b32.cont [15/16] %v1949, 128
        %2034 = vxpose.xlu0.b32.end [16/16] %v1952, 128
        %v2035 = vpop.trf.xlu0
        %v2036 = vpop.trf.xlu0
        %v2037 = vpop.trf.xlu0
        %v2038 = vpop.trf.xlu0
        %v2039 = vpop.trf.xlu0
        %v2040 = vpop.trf.xlu0
        %v2041 = vpop.trf.xlu0
        %v2042 = vpop.trf.xlu0
        %v2043 = vpop.trf.xlu0
        %v2044 = vpop.trf.xlu0
        %v2045 = vpop.trf.xlu0
        %v2046 = vpop.trf.xlu0
        %v2047 = vpop.trf.xlu0
        %v2048 = vpop.trf.xlu0
        %v2049 = vpop.trf.xlu0
        %v2050 = vpop.trf.xlu0
        %2051 = vxpose.xlu0.b32.start [1/16] %v1957, 128
        %2052 = vxpose.xlu0.b32.cont [2/16] %v1960, 128
        %2053 = vxpose.xlu0.b32.cont [3/16] %v1965, 128
        %2054 = vxpose.xlu0.b32.cont [4/16] %v1968, 128
        %2055 = vxpose.xlu0.b32.cont [5/16] %v1973, 128
        %2056 = vxpose.xlu0.b32.cont [6/16] %v1976, 128
        %2057 = vxpose.xlu0.b32.cont [7/16] %v1981, 128
        %2058 = vxpose.xlu0.b32.cont [8/16] %v1984, 128
        %2059 = vxpose.xlu0.b32.cont [9/16] %v1989, 128
        %2060 = vxpose.xlu0.b32.cont [10/16] %v1992, 128
        %2061 = vxpose.xlu0.b32.cont [11/16] %v1997, 128
        %2062 = vxpose.xlu0.b32.cont [12/16] %v2000, 128
        %2063 = vxpose.xlu0.b32.cont [13/16] %v2005, 128
        %2064 = vxpose.xlu0.b32.cont [14/16] %v2008, 128
        %2065 = vxpose.xlu0.b32.cont [15/16] %v2013, 128
        %2066 = vxpose.xlu0.b32.end [16/16] %v2016, 128
        %v2067 = vpop.trf.xlu0
        %v2068 = vpop.trf.xlu0
        %v2069 = vpop.trf.xlu0
        %v2070 = vpop.trf.xlu0
        %v2071 = vpop.trf.xlu0
        %v2072 = vpop.trf.xlu0
        %v2073 = vpop.trf.xlu0
        %v2074 = vpop.trf.xlu0
        %v2075 = vpop.trf.xlu0
        %v2076 = vpop.trf.xlu0
        %v2077 = vpop.trf.xlu0
        %v2078 = vpop.trf.xlu0
        %v2079 = vpop.trf.xlu0
        %v2080 = vpop.trf.xlu0
        %v2081 = vpop.trf.xlu0
        %v2082 = vpop.trf.xlu0
        %2083 = vst [vmem:[%s340] sm:$0xff] %v2035
        %2084 = vst [vmem:[%s340 + $0x8] sm:$0xff] %v2067
        %s2085 = sand.u32 %s186, 1
        %s2086 = scalar_lea.sflag [#allocation4], %s2085
        %s2087 = sand.u32 %s186, 1
        %s2088 = smul.addr %s2087, 16
        %s2089 = scalar_lea.vmem [#allocation10], %s2088
        // Predicated region
        $region65: #{tpu_custom_call.1} parent=47 // pred_check
          %p2090 = pneg %p196
        $region66: #{tpu_custom_call.1} parent=47 // pred_check_branch
          %2092 = sbr.rel (%p2090) target = $region68
        $region67: #{tpu_custom_call.1} parent=47 // pred_region
          %s2094 = ssub.s32 256, 256
          %2095 = vsyncadd %s2086, %s2094
          %s2096 = smul.addr %s26, 2
          %s2097 = smul.addr %s2096, 128
          %s2098 = scalar_lea.hbm %s7, %s2097
          %s2100 = sshll.u32 %s2089, 4
          %s2101 = int_to_ptr.vmem [resolvable:$true] %s2100
          %2103 = dma.vmem_to_hbm [thread:$0]  %s2101, 256, %s2098, %s2086
        $region68: #{tpu_custom_call.1} parent=47 // pred_fallthru
          _
      $region48: #{tpu_custom_call.1} parent=5 // pred_fallthru
        _
      %p2104 = scmp.le.s32.totalorder 2, %s21
      // Predicated region
      $region69: #{tpu_custom_call.1} parent=5 // pred_check
        %p2105 = pneg %p2104
      $region70: #{tpu_custom_call.1} parent=5 // pred_check_branch
        %2107 = sbr.rel (%p2105) target = $region72
      $region71: #{tpu_custom_call.1} parent=5 // pred_region
        %s2108 = ssub.s32 %s21, 2
        // Predicated region
        $region73: #{tpu_custom_call.1} parent=71 // pred_check
          %p2109 = pneg %p202
        $region74: #{tpu_custom_call.1} parent=71 // pred_check_branch
          %2111 = sbr.rel (%p2109) target = $region76
        $region75: #{tpu_custom_call.1} parent=71 // pred_region
          %s2112 = sand.u32 %s187, 1
          %s2113 = scalar_lea.sflag [#allocation4], %s2112
          %s2114 = sand.u32 %s187, 1
          %s2115 = smul.addr %s2114, 16
          %s2116 = scalar_lea.vmem [#allocation10], %s2115
          %2117 = dma.done %s2113, 256
        $region76: #{tpu_custom_call.1} parent=71 // pred_fallthru
          _
      $region72: #{tpu_custom_call.1} parent=5 // pred_fallthru
        _
    $region6: #{tpu_custom_call.1} parent=1 // loop_footer
      %s25 = sadd.s32 1, %s21
    $region7: #{tpu_custom_call.1} parent=1 // loop_footer_branch
      %20 = sbr.rel target = $region3
    $region8: #{tpu_custom_call.1} parent=1 // loop_exit
      _
    %2118 = vsyncpa [#allocation3], 1
    %s2119 = scalar_lea.sflag [#allocation3], 1
    %2120 = vsyncpa %s2119, 1
    %2121 = vsyncpa [#allocation6], 1
    %2122 = vsyncpa [#allocation9], 1
    %2123 = vsyncpa [#allocation4], 1
    %s2124 = scalar_lea.sflag [#allocation4], 1
    %2125 = vsyncpa %s2124, 1

</llo_original>
